<compile_context>
chip_gen: v6e
topology: v6e:2x2x1
jax: 0.10.0
libtpu: 0.0.40
codegen_flags: <defaults>
</compile_context>

<pallas_src>
import numpy as np
import jax
import jax.numpy as jnp
from jax.experimental import pallas as pl
from jax.experimental.pallas import tpu as pltpu

C_IN = 3
C_OUT = 4
KH = KW = 3
SPATIAL = 16                      # post-transpose spatial size (both dims)
PAD = SPATIAL + 2                 # 18 (spatial + 1 zero pad each side)
POOLED = SPATIAL // 2             # 8
LANES_IN = C_IN * PAD             # 54  lanes of the packed conv input
LANES_CONV = C_OUT * SPATIAL      # 64  conv-out lanes = [even(32) | odd(32)] pooled cols
LANES_POOL = C_OUT * POOLED       # 32  lanes after the column pool (co*8 + col')
INPUT_SAMPLES = C_OUT * POOLED * POOLED   # 256 -> fc1 in-features
HIDDEN = 16
EXTRA = 3                         # vitesse (1) + goal (2)
OUT_FEATURES = 5


def dqn_kernel(x_ref, wf_ref, cb_ref, w1_ref, b1_ref,
               w2h_ref, w2e_ref, b2_ref, extras_ref, o_ref):
    tb = o_ref.shape[0]
    x2 = x_ref[0]                                       # (18*TB, 54) bf16

    # ---- 3x3 / pad=1 conv (column-pool selectors pre-fused into wf) as 3
    # banded MXU matmuls.  acc rows = (out_row, sample); lanes = [even | odd]
    # pooled columns, each half ordered co*8 + c'.
    acc = jnp.dot(x2[0:SPATIAL * tb, :], wf_ref[0],
                  preferred_element_type=jnp.float32)   # (16*TB, 64) f32
    for dy in range(1, KH):
        acc = acc + jnp.dot(x2[dy * tb:(dy + SPATIAL) * tb, :], wf_ref[dy],
                            preferred_element_type=jnp.float32)

    # ---- column half of the 2x2 max-pool: max of even/odd lane halves (VPU).
    yl = jnp.maximum(acc[:, :LANES_POOL], acc[:, LANES_POOL:])   # (16*TB, 32)

    # ---- row half of the pool; lane-concatenate the 8 pooled rows -> (TB,256)
    parts = []
    for p in range(POOLED):
        parts.append(jnp.maximum(yl[(2 * p) * tb:(2 * p + 1) * tb, :],
                                 yl[(2 * p + 1) * tb:(2 * p + 2) * tb, :]))
    feat = jnp.concatenate(parts, axis=-1)                        # (TB, 256)
    # conv bias is exact after the pool (all 4 pooled taps share it) + ReLU
    feat = jnp.maximum(feat + cb_ref[...], 0.0)

    # ---- fc1: single (TB,256)@(256,16) matmul, then ReLU
    h = jnp.dot(feat.astype(jnp.bfloat16), w1_ref[...],
                preferred_element_type=jnp.float32) + b1_ref[...]
    h = jnp.maximum(h, 0.0)

    # ---- fc2 over [h, vitesse, goal]: two small matmuls + bias
    out = jnp.dot(h.astype(jnp.bfloat16), w2h_ref[...],
                  preferred_element_type=jnp.float32)
    out = out + jnp.dot(extras_ref[...], w2e_ref[...],
                        preferred_element_type=jnp.float32)
    o_ref[...] = out + b2_ref[...]                                # (TB, 5)


def _choose_tb(n):
    """TB multiple of 16, capped at 256, and grid >= 2 whenever n allows it."""
    cap = 256
    if n < 32:
        return 16
    tb = 16
    while tb * 2 <= cap and tb * 2 <= n // 2:
        tb *= 2
    return tb


def _pool_select_matrix():
    """(64, 64) 0/1 matrix mapping conv lanes (co*16+col) to
    [even(32) | odd(32)] pooled-column lanes (half*32 + co*8 + c')."""
    r = np.arange(LANES_CONV)                       # co*16 + jout
    c = np.arange(LANES_CONV)                       # half*32 + co*8 + c'
    half = c // LANES_POOL
    cc = c % LANES_POOL
    same = (r[:, None] // SPATIAL) == (cc[None, :] // POOLED)
    hit = same & ((r[:, None] % SPATIAL) == 2 * (cc[None, :] % POOLED) + half[None, :])
    return hit.astype(np.float32)


@jax.jit
def dqn_forward(x, vitesse, goal, params):
    n = x.shape[0]
    tb = _choose_tb(n)
    n_pad = ((n + tb - 1) // tb) * tb
    grid = n_pad // tb

    # ---- pack the image once, in bf16:
    # xg[g, rp*TB + b, ci*18 + cp] = padded(transpose(x, (0,3,2,1)))[g*TB+b, ci, rp, cp]
    xb = jnp.pad(x.astype(jnp.bfloat16), ((0, n_pad - n), (0, 0), (0, 0), (0, 0)))
    xb = xb.reshape(grid, tb, SPATIAL, SPATIAL, C_IN)      # (g, b, h, w, c)
    xb = jnp.transpose(xb, (0, 3, 1, 4, 2))                # (g, w, b, c, h)
    xb = jnp.pad(xb, ((0, 0), (1, 1), (0, 0), (0, 0), (1, 1)))
    xg = xb.reshape(grid, PAD * tb, LANES_IN)              # (G, 18*TB, 54)

    # ---- banded conv weights, with the column-pool selectors fused in:
    # wband[dy, ci*18 + jin, co*16 + jout] = w[co, ci, dy, jin - jout]
    cw = params["conv_w"].astype(jnp.float32)              # (4, 3, 3, 3)
    dxo = np.arange(PAD)[:, None] - np.arange(SPATIAL)[None, :]
    valid = jnp.asarray(((dxo >= 0) & (dxo < KW)).astype(np.float32))
    dxc = np.clip(dxo, 0, KW - 1)
    g = cw[:, :, :, dxc] * valid                           # (co, ci, dy, jin, jout)
    wband = jnp.transpose(g, (2, 1, 3, 0, 4)).reshape(KH, LANES_IN, LANES_CONV)
    sel = jnp.asarray(_pool_select_matrix())               # (64, 64)
    wf = jnp.matmul(wband, sel).astype(jnp.bfloat16)       # (3, 54, 64) fused

    # conv bias, delayed to after the pool, in fc1-input lane order (p*32+co*8+c')
    cb = jnp.tile(jnp.repeat(params["conv_b"].astype(jnp.float32), POOLED),
                  POOLED).reshape(1, INPUT_SAMPLES)

    # fc1 weights permuted to kernel lane order: row = p*32 + co*8 + c'
    w1 = params["w1"].astype(jnp.float32).reshape(C_OUT, POOLED, POOLED, HIDDEN)
    w1r = jnp.transpose(w1, (1, 0, 2, 3)).reshape(INPUT_SAMPLES, HIDDEN)
    w1r = w1r.astype(jnp.bfloat16)
    b1 = params["b1"].reshape(1, HIDDEN).astype(jnp.float32)
    w2h = params["w2"][:HIDDEN].astype(jnp.bfloat16)       # (16, 5)
    w2e = params["w2"][HIDDEN:].astype(jnp.bfloat16)       # (3, 5)
    b2 = params["b2"].reshape(1, OUT_FEATURES).astype(jnp.float32)

    extras = jnp.concatenate([vitesse.reshape(-1, 1),
                              goal.reshape(-1, 2)], axis=1).astype(jnp.bfloat16)
    extras = jnp.pad(extras, ((0, n_pad - n), (0, 0)))     # (N_pad, 3)

    out = pl.pallas_call(
        dqn_kernel,
        out_shape=jax.ShapeDtypeStruct((n_pad, OUT_FEATURES), jnp.float32),
        grid=(grid,),
        in_specs=[
            pl.BlockSpec((1, PAD * tb, LANES_IN), lambda i: (i, 0, 0)),       # packed x
            pl.BlockSpec((KH, LANES_IN, LANES_CONV), lambda i: (0, 0, 0)),    # fused conv w
            pl.BlockSpec((1, INPUT_SAMPLES), lambda i: (0, 0)),               # conv bias row
            pl.BlockSpec((INPUT_SAMPLES, HIDDEN), lambda i: (0, 0)),          # fc1 w (perm.)
            pl.BlockSpec((1, HIDDEN), lambda i: (0, 0)),                      # fc1 b
            pl.BlockSpec((HIDDEN, OUT_FEATURES), lambda i: (0, 0)),           # fc2 w (h)
            pl.BlockSpec((EXTRA, OUT_FEATURES), lambda i: (0, 0)),            # fc2 w (extras)
            pl.BlockSpec((1, OUT_FEATURES), lambda i: (0, 0)),                # fc2 b
            pl.BlockSpec((tb, EXTRA), lambda i: (i, 0)),                      # vitesse/goal
        ],
        out_specs=pl.BlockSpec((tb, OUT_FEATURES), lambda i: (i, 0)),
        compiler_params=pltpu.CompilerParams(
            dimension_semantics=("parallel",),
            vmem_limit_bytes=32 * 1024 * 1024),
    )(xg, wf, cb, w1r, b1, w2h, w2e, b2, extras)
    return out[:n]


def dqn_reference(x, vitesse, goal, params):
    """Pure-JAX f32 reference matching the PyTorch forward exactly."""
    xt = jnp.transpose(x, (0, 3, 2, 1)).astype(jnp.float32)
    y = jax.lax.conv_general_dilated(
        xt, params["conv_w"], window_strides=(1, 1), padding=((1, 1), (1, 1)),
        dimension_numbers=("NCHW", "OIHW", "NCHW"))
    y = y + params["conv_b"][None, :, None, None]
    y = jax.lax.reduce_window(y, -jnp.inf, jax.lax.max,
                              (1, 1, 2, 2), (1, 1, 2, 2), "VALID")
    y = y.reshape(y.shape[0], -1)
    y = jax.nn.relu(y)
    y = jax.nn.relu(y @ params["w1"] + params["b1"])
    feat = jnp.concatenate(
        [y, vitesse.reshape(-1, 1), goal.reshape(-1, 2)], axis=1).astype(jnp.float32)
    return feat @ params["w2"] + params["b2"]


if __name__ == "__main__":
    # TODO(synk): the PyTorch module's `Memory()` replay buffer is stateful
    # bookkeeping unrelated to the forward pass; it is not implemented here.
    key = jax.random.PRNGKey(0)
    keys = jax.random.split(key, 9)
    N = 2
    x = jax.random.normal(keys[0], (N, SPATIAL, SPATIAL, C_IN), jnp.float32)
    vitesse = jax.random.normal(keys[1], (N,), jnp.float32)
    goal = jax.random.normal(keys[2], (N, 2), jnp.float32)

    params = {
        "conv_w": 0.2 * jax.random.normal(keys[3], (C_OUT, C_IN, KH, KW), jnp.float32),
        "conv_b": 0.1 * jax.random.normal(keys[4], (C_OUT,), jnp.float32),
        "w1": 0.1 * jax.random.normal(keys[5], (INPUT_SAMPLES, HIDDEN), jnp.float32),
        "b1": 0.1 * jax.random.normal(keys[6], (HIDDEN,), jnp.float32),
        "w2": 0.1 * jax.random.normal(keys[7], (HIDDEN + EXTRA, OUT_FEATURES), jnp.float32),
        "b2": 0.1 * jax.random.normal(keys[8], (OUT_FEATURES,), jnp.float32),
    }

    out = jax.block_until_ready(dqn_forward(x, vitesse, goal, params))
    ref = dqn_reference(x, vitesse, goal, params)
    np.testing.assert_allclose(np.asarray(out), np.asarray(ref), rtol=2e-2, atol=2e-2)

    # Second check: batch needing padding and >1 grid step (TB=16, grid=3).
    N2 = 40
    x2 = jax.random.normal(keys[0], (N2, SPATIAL, SPATIAL, C_IN), jnp.float32)
    v2 = jax.random.normal(keys[1], (N2,), jnp.float32)
    g2 = jax.random.normal(keys[2], (N2, 2), jnp.float32)
    out2 = jax.block_until_ready(dqn_forward(x2, v2, g2, params))
    ref2 = dqn_reference(x2, v2, g2, params)
    np.testing.assert_allclose(np.asarray(out2), np.asarray(ref2), rtol=2e-2, atol=2e-2)

    print("KERNEL_OK")
</pallas_src>

<mosaic_0001>
module attributes {stable_mosaic.version = 11 : i64} {
  func.func @dqn_kernel(%arg0: i32, %arg1: memref<1x288x54xbf16, #tpu.memory_space<vmem>>, %arg2: memref<3x54x64xbf16, #tpu.memory_space<vmem>>, %arg3: memref<1x256xf32, #tpu.memory_space<vmem>>, %arg4: memref<256x16xbf16, #tpu.memory_space<vmem>>, %arg5: memref<1x16xf32, #tpu.memory_space<vmem>>, %arg6: memref<16x5xbf16, #tpu.memory_space<vmem>>, %arg7: memref<3x5xbf16, #tpu.memory_space<vmem>>, %arg8: memref<1x5xf32, #tpu.memory_space<vmem>>, %arg9: memref<16x3xbf16, #tpu.memory_space<vmem>>, %arg10: memref<16x5xf32, #tpu.memory_space<vmem>>) attributes {dimension_semantics = [#tpu.dimension_semantics<parallel>], iteration_bounds = array<i64: 1>, scalar_prefetch = 0 : i64, scratch_operands = 0 : i64, tpu.core_type = #tpu.core_type<tc>, window_params = [{transform_indices = @transform_0, window_bounds = array<i64: 1, 288, 54>}, {pipeline_mode = #tpu.pipeline_mode<synchronous>, transform_indices = @transform_1, window_bounds = array<i64: 3, 54, 64>}, {pipeline_mode = #tpu.pipeline_mode<synchronous>, transform_indices = @transform_2, window_bounds = array<i64: 1, 256>}, {pipeline_mode = #tpu.pipeline_mode<synchronous>, transform_indices = @transform_3, window_bounds = array<i64: 256, 16>}, {pipeline_mode = #tpu.pipeline_mode<synchronous>, transform_indices = @transform_4, window_bounds = array<i64: 1, 16>}, {pipeline_mode = #tpu.pipeline_mode<synchronous>, transform_indices = @transform_5, window_bounds = array<i64: 16, 5>}, {pipeline_mode = #tpu.pipeline_mode<synchronous>, transform_indices = @transform_6, window_bounds = array<i64: 3, 5>}, {pipeline_mode = #tpu.pipeline_mode<synchronous>, transform_indices = @transform_7, window_bounds = array<i64: 1, 5>}, {transform_indices = @transform_8, window_bounds = array<i64: 16, 3>}, {transform_indices = @transform_9, window_bounds = array<i64: 16, 5>}]} {
    %c0 = arith.constant 0 : index
    %c0_0 = arith.constant 0 : index
    %c0_1 = arith.constant 0 : index
    %0 = vector.load %arg1[%c0, %c0_0, %c0_1] : memref<1x288x54xbf16, #tpu.memory_space<vmem>>, vector<1x288x54xbf16>
    %1 = vector.shape_cast %0 : vector<1x288x54xbf16> to vector<288x54xbf16>
    %2 = vector.extract_strided_slice %1 {offsets = [0, 0], sizes = [256, 54], strides = [1, 1]} : vector<288x54xbf16> to vector<256x54xbf16>
    %c0_2 = arith.constant 0 : index
    %c0_3 = arith.constant 0 : index
    %c0_4 = arith.constant 0 : index
    %3 = vector.load %arg2[%c0_2, %c0_3, %c0_4] : memref<3x54x64xbf16, #tpu.memory_space<vmem>>, vector<1x54x64xbf16>
    %4 = vector.shape_cast %3 : vector<1x54x64xbf16> to vector<54x64xbf16>
    %cst = arith.constant dense<0.000000e+00> : vector<256x64xf32>
    %5 = tpu.matmul %2, %4, %cst {dimension_numbers = #tpu.dot_dimension_numbers<[1], [0], [0], [1], [0, 0, 1, 1], [], []>} : vector<256x54xbf16>, vector<54x64xbf16>, vector<256x64xf32> -> vector<256x64xf32>
    %6 = vector.extract_strided_slice %1 {offsets = [16, 0], sizes = [256, 54], strides = [1, 1]} : vector<288x54xbf16> to vector<256x54xbf16>
    %c1 = arith.constant 1 : index
    %c0_5 = arith.constant 0 : index
    %c0_6 = arith.constant 0 : index
    %7 = vector.load %arg2[%c1, %c0_5, %c0_6] : memref<3x54x64xbf16, #tpu.memory_space<vmem>>, vector<1x54x64xbf16>
    %8 = vector.shape_cast %7 : vector<1x54x64xbf16> to vector<54x64xbf16>
    %cst_7 = arith.constant dense<0.000000e+00> : vector<256x64xf32>
    %9 = tpu.matmul %6, %8, %cst_7 {dimension_numbers = #tpu.dot_dimension_numbers<[1], [0], [0], [1], [0, 0, 1, 1], [], []>} : vector<256x54xbf16>, vector<54x64xbf16>, vector<256x64xf32> -> vector<256x64xf32>
    %10 = arith.addf %5, %9 : vector<256x64xf32>
    %11 = vector.extract_strided_slice %1 {offsets = [32, 0], sizes = [256, 54], strides = [1, 1]} : vector<288x54xbf16> to vector<256x54xbf16>
    %c2 = arith.constant 2 : index
    %c0_8 = arith.constant 0 : index
    %c0_9 = arith.constant 0 : index
    %12 = vector.load %arg2[%c2, %c0_8, %c0_9] : memref<3x54x64xbf16, #tpu.memory_space<vmem>>, vector<1x54x64xbf16>
    %13 = vector.shape_cast %12 : vector<1x54x64xbf16> to vector<54x64xbf16>
    %cst_10 = arith.constant dense<0.000000e+00> : vector<256x64xf32>
    %14 = tpu.matmul %11, %13, %cst_10 {dimension_numbers = #tpu.dot_dimension_numbers<[1], [0], [0], [1], [0, 0, 1, 1], [], []>} : vector<256x54xbf16>, vector<54x64xbf16>, vector<256x64xf32> -> vector<256x64xf32>
    %15 = arith.addf %10, %14 : vector<256x64xf32>
    %16 = vector.extract_strided_slice %15 {offsets = [0, 0], sizes = [256, 32], strides = [1, 1]} : vector<256x64xf32> to vector<256x32xf32>
    %17 = vector.extract_strided_slice %15 {offsets = [0, 32], sizes = [256, 32], strides = [1, 1]} : vector<256x64xf32> to vector<256x32xf32>
    %18 = arith.maximumf %16, %17 : vector<256x32xf32>
    %19 = vector.extract_strided_slice %18 {offsets = [0, 0], sizes = [16, 32], strides = [1, 1]} : vector<256x32xf32> to vector<16x32xf32>
    %20 = vector.extract_strided_slice %18 {offsets = [16, 0], sizes = [16, 32], strides = [1, 1]} : vector<256x32xf32> to vector<16x32xf32>
    %21 = arith.maximumf %19, %20 : vector<16x32xf32>
    %22 = vector.extract_strided_slice %18 {offsets = [32, 0], sizes = [16, 32], strides = [1, 1]} : vector<256x32xf32> to vector<16x32xf32>
    %23 = vector.extract_strided_slice %18 {offsets = [48, 0], sizes = [16, 32], strides = [1, 1]} : vector<256x32xf32> to vector<16x32xf32>
    %24 = arith.maximumf %22, %23 : vector<16x32xf32>
    %25 = vector.extract_strided_slice %18 {offsets = [64, 0], sizes = [16, 32], strides = [1, 1]} : vector<256x32xf32> to vector<16x32xf32>
    %26 = vector.extract_strided_slice %18 {offsets = [80, 0], sizes = [16, 32], strides = [1, 1]} : vector<256x32xf32> to vector<16x32xf32>
    %27 = arith.maximumf %25, %26 : vector<16x32xf32>
    %28 = vector.extract_strided_slice %18 {offsets = [96, 0], sizes = [16, 32], strides = [1, 1]} : vector<256x32xf32> to vector<16x32xf32>
    %29 = vector.extract_strided_slice %18 {offsets = [112, 0], sizes = [16, 32], strides = [1, 1]} : vector<256x32xf32> to vector<16x32xf32>
    %30 = arith.maximumf %28, %29 : vector<16x32xf32>
    %31 = vector.extract_strided_slice %18 {offsets = [128, 0], sizes = [16, 32], strides = [1, 1]} : vector<256x32xf32> to vector<16x32xf32>
    %32 = vector.extract_strided_slice %18 {offsets = [144, 0], sizes = [16, 32], strides = [1, 1]} : vector<256x32xf32> to vector<16x32xf32>
    %33 = arith.maximumf %31, %32 : vector<16x32xf32>
    %34 = vector.extract_strided_slice %18 {offsets = [160, 0], sizes = [16, 32], strides = [1, 1]} : vector<256x32xf32> to vector<16x32xf32>
    %35 = vector.extract_strided_slice %18 {offsets = [176, 0], sizes = [16, 32], strides = [1, 1]} : vector<256x32xf32> to vector<16x32xf32>
    %36 = arith.maximumf %34, %35 : vector<16x32xf32>
    %37 = vector.extract_strided_slice %18 {offsets = [192, 0], sizes = [16, 32], strides = [1, 1]} : vector<256x32xf32> to vector<16x32xf32>
    %38 = vector.extract_strided_slice %18 {offsets = [208, 0], sizes = [16, 32], strides = [1, 1]} : vector<256x32xf32> to vector<16x32xf32>
    %39 = arith.maximumf %37, %38 : vector<16x32xf32>
    %40 = vector.extract_strided_slice %18 {offsets = [224, 0], sizes = [16, 32], strides = [1, 1]} : vector<256x32xf32> to vector<16x32xf32>
    %41 = vector.extract_strided_slice %18 {offsets = [240, 0], sizes = [16, 32], strides = [1, 1]} : vector<256x32xf32> to vector<16x32xf32>
    %42 = arith.maximumf %40, %41 : vector<16x32xf32>
    %43 = tpu.concatenate %21, %24, %27, %30, %33, %36, %39, %42 in 1 : vector<16x32xf32>, vector<16x32xf32>, vector<16x32xf32>, vector<16x32xf32>, vector<16x32xf32>, vector<16x32xf32>, vector<16x32xf32>, vector<16x32xf32> -> vector<16x256xf32>
    %c0_11 = arith.constant 0 : index
    %c0_12 = arith.constant 0 : index
    %44 = vector.load %arg3[%c0_11, %c0_12] : memref<1x256xf32, #tpu.memory_space<vmem>>, vector<1x256xf32>
    %45 = vector.broadcast %44 : vector<1x256xf32> to vector<16x256xf32>
    %46 = arith.addf %43, %45 : vector<16x256xf32>
    %cst_13 = arith.constant 0.000000e+00 : f32
    %47 = vector.broadcast %cst_13 : f32 to vector<16x256xf32>
    %48 = arith.maximumf %46, %47 : vector<16x256xf32>
    %49 = arith.truncf %48 : vector<16x256xf32> to vector<16x256xbf16>
    %c0_14 = arith.constant 0 : index
    %c0_15 = arith.constant 0 : index
    %50 = vector.load %arg4[%c0_14, %c0_15] : memref<256x16xbf16, #tpu.memory_space<vmem>>, vector<256x16xbf16>
    %cst_16 = arith.constant dense<0.000000e+00> : vector<16x16xf32>
    %51 = tpu.matmul %49, %50, %cst_16 {dimension_numbers = #tpu.dot_dimension_numbers<[1], [0], [0], [1], [0, 0, 1, 1], [], []>} : vector<16x256xbf16>, vector<256x16xbf16>, vector<16x16xf32> -> vector<16x16xf32>
    %c0_17 = arith.constant 0 : index
    %c0_18 = arith.constant 0 : index
    %52 = vector.load %arg5[%c0_17, %c0_18] : memref<1x16xf32, #tpu.memory_space<vmem>>, vector<1x16xf32>
    %53 = vector.broadcast %52 : vector<1x16xf32> to vector<16x16xf32>
    %54 = arith.addf %51, %53 : vector<16x16xf32>
    %cst_19 = arith.constant 0.000000e+00 : f32
    %55 = vector.broadcast %cst_19 : f32 to vector<16x16xf32>
    %56 = arith.maximumf %54, %55 : vector<16x16xf32>
    %57 = arith.truncf %56 : vector<16x16xf32> to vector<16x16xbf16>
    %c0_20 = arith.constant 0 : index
    %c0_21 = arith.constant 0 : index
    %58 = vector.load %arg6[%c0_20, %c0_21] : memref<16x5xbf16, #tpu.memory_space<vmem>>, vector<16x5xbf16>
    %cst_22 = arith.constant dense<0.000000e+00> : vector<16x5xf32>
    %59 = tpu.matmul %57, %58, %cst_22 {dimension_numbers = #tpu.dot_dimension_numbers<[1], [0], [0], [1], [0, 0, 1, 1], [], []>} : vector<16x16xbf16>, vector<16x5xbf16>, vector<16x5xf32> -> vector<16x5xf32>
    %c0_23 = arith.constant 0 : index
    %c0_24 = arith.constant 0 : index
    %60 = vector.load %arg9[%c0_23, %c0_24] : memref<16x3xbf16, #tpu.memory_space<vmem>>, vector<16x3xbf16>
    %c0_25 = arith.constant 0 : index
    %c0_26 = arith.constant 0 : index
    %61 = vector.load %arg7[%c0_25, %c0_26] : memref<3x5xbf16, #tpu.memory_space<vmem>>, vector<3x5xbf16>
    %cst_27 = arith.constant dense<0.000000e+00> : vector<16x5xf32>
    %62 = tpu.matmul %60, %61, %cst_27 {dimension_numbers = #tpu.dot_dimension_numbers<[1], [0], [0], [1], [0, 0, 1, 1], [], []>} : vector<16x3xbf16>, vector<3x5xbf16>, vector<16x5xf32> -> vector<16x5xf32>
    %63 = arith.addf %59, %62 : vector<16x5xf32>
    %c0_28 = arith.constant 0 : index
    %c0_29 = arith.constant 0 : index
    %64 = vector.load %arg8[%c0_28, %c0_29] : memref<1x5xf32, #tpu.memory_space<vmem>>, vector<1x5xf32>
    %65 = vector.broadcast %64 : vector<1x5xf32> to vector<16x5xf32>
    %66 = arith.addf %63, %65 : vector<16x5xf32>
    %c0_30 = arith.constant 0 : index
    %c0_31 = arith.constant 0 : index
    %67 = vector.load %arg10[%c0_30, %c0_31] : memref<16x5xf32, #tpu.memory_space<vmem>>, vector<16x5xf32>
    tpu.vector_store %arg10[%c0_30, %c0_31], %66 {strides = array<i32>} : memref<16x5xf32, #tpu.memory_space<vmem>>, vector<16x5xf32>,
    return
  }
  func.func @transform_0(%arg0: i32) -> (i32, i32, i32) {
    %c0_i32 = arith.constant 0 : i32
    %c0_i32_0 = arith.constant 0 : i32
    %c0_i32_1 = arith.constant 0 : i32
    return %arg0, %c0_i32, %c0_i32_0 : i32, i32, i32
  }
  func.func @transform_1(%arg0: i32) -> (i32, i32, i32) {
    %c0_i32 = arith.constant 0 : i32
    %c0_i32_0 = arith.constant 0 : i32
    %c0_i32_1 = arith.constant 0 : i32
    %c0_i32_2 = arith.constant 0 : i32
    return %c0_i32, %c0_i32_0, %c0_i32_1 : i32, i32, i32
  }
  func.func @transform_2(%arg0: i32) -> (i32, i32) {
    %c0_i32 = arith.constant 0 : i32
    %c0_i32_0 = arith.constant 0 : i32
    %c0_i32_1 = arith.constant 0 : i32
    return %c0_i32, %c0_i32_0 : i32, i32
  }
  func.func @transform_3(%arg0: i32) -> (i32, i32) {
    %c0_i32 = arith.constant 0 : i32
    %c0_i32_0 = arith.constant 0 : i32
    %c0_i32_1 = arith.constant 0 : i32
    return %c0_i32, %c0_i32_0 : i32, i32
  }
  func.func @transform_4(%arg0: i32) -> (i32, i32) {
    %c0_i32 = arith.constant 0 : i32
    %c0_i32_0 = arith.constant 0 : i32
    %c0_i32_1 = arith.constant 0 : i32
    return %c0_i32, %c0_i32_0 : i32, i32
  }
  func.func @transform_5(%arg0: i32) -> (i32, i32) {
    %c0_i32 = arith.constant 0 : i32
    %c0_i32_0 = arith.constant 0 : i32
    %c0_i32_1 = arith.constant 0 : i32
    return %c0_i32, %c0_i32_0 : i32, i32
  }
  func.func @transform_6(%arg0: i32) -> (i32, i32) {
    %c0_i32 = arith.constant 0 : i32
    %c0_i32_0 = arith.constant 0 : i32
    %c0_i32_1 = arith.constant 0 : i32
    return %c0_i32, %c0_i32_0 : i32, i32
  }
  func.func @transform_7(%arg0: i32) -> (i32, i32) {
    %c0_i32 = arith.constant 0 : i32
    %c0_i32_0 = arith.constant 0 : i32
    %c0_i32_1 = arith.constant 0 : i32
    return %c0_i32, %c0_i32_0 : i32, i32
  }
  func.func @transform_8(%arg0: i32) -> (i32, i32) {
    %c0_i32 = arith.constant 0 : i32
    %c0_i32_0 = arith.constant 0 : i32
    return %arg0, %c0_i32 : i32, i32
  }
  func.func @transform_9(%arg0: i32) -> (i32, i32) {
    %c0_i32 = arith.constant 0 : i32
    %c0_i32_0 = arith.constant 0 : i32
    return %arg0, %c0_i32 : i32, i32
  }
}

</mosaic_0001>

<llo_original>
// kernel: tile.5
$region0: #{tile.5}
  %s0 = inlined_call_operand.vmem [shape: f32[4,8], index: 0, kind: input, shape index: {}]
  %s1 = inlined_call_operand.vmem [shape: f32[32], index: 1, kind: output, shape index: {}]
  $region1: #{tile.5} parent=0
    #allocation0 [shape = 'u8[4096]{0}', space=vmem, size = 0x1000, scoped, tag = 'scoped mem for output reshape']
    #allocation1 [shape = 'u8[4096]{0}', space=vmem, size = 0x1000, scoped, tag = 'scoped mem for input reshape']
    %s3 = sshll.u32 1, 4
    %s4 = ssub.s32 %s3, 1
    %v5 = vld [vmem:[%s0] sm:%s4]
    %6 = vst [vmem:[#allocation1] sm:%s4] %v5
    %v7 = vld [vmem:[#allocation1] sm:$0x1]
    %vm8 = vcmask 64512
    %9 = vst.msk [vmem:[#allocation0] sm:$0x1] %vm8, %v7
    %s10 = scalar_lea.vmem [#allocation1], 3
    %v11 = vld [vmem:[%s10] sm:$0x1]
    %12 = vrot.lane.b32.xlu0 %v11, 24
    %v13 = vpop.permute.xlu0 %12
    %vm14 = vcmask 261312
    %15 = vst.msk [vmem:[#allocation0] sm:$0x1] %vm14, %v13
    %s16 = scalar_lea.vmem [#allocation1], 2
    %v17 = vld [vmem:[%s16] sm:$0x1]
    %18 = vrot.lane.b32.xlu0 %v17, 16
    %v19 = vpop.permute.xlu0 %18
    %vm20 = vcmask 195712
    %21 = vst.msk [vmem:[#allocation0] sm:$0x1] %vm20, %v19
    %s22 = scalar_lea.vmem [#allocation1], 1
    %v23 = vld [vmem:[%s22] sm:$0x1]
    %24 = vrot.lane.b32.xlu0 %v23, 8
    %v25 = vpop.permute.xlu0 %24
    %vm26 = vcmask 130112
    %27 = vst.msk [vmem:[#allocation0] sm:$0x1] %vm26, %v25
    %s29 = sshll.u32 1, 1
    %s30 = ssub.s32 %s29, 1
    %v32 = vld [vmem:[#allocation0] sm:%s30]
    %s33 = sshll.u32 1, 1
    %s34 = ssub.s32 %s33, 1
    %35 = vst [vmem:[%s1] sm:%s34] %v32

// kernel: tile.7
$region0: #{tile.7}
  %s0 = inlined_call_operand.vmem [shape: f32[8,32], index: 0, kind: input, shape index: {}]
  %s1 = inlined_call_operand.vmem [shape: f32[1,256], index: 1, kind: output, shape index: {}]
  $region1: #{tile.7} parent=0
    #allocation0 [shape = 'u8[8192]{0}', space=vmem, size = 0x2000, scoped, tag = 'scoped mem for output reshape']
    %s2 = smov 3
    %v3 = vld [vmem:[%s0] ss:$4 sm:%s2]
    %vm4 = vcmask 261120
    %5 = vst.msk [vmem:[#allocation0] ss:$8 sm:$0x3] %vm4, %v3
    %s6 = scalar_lea.vmem %s0, 3
    %s7 = smov 3
    %v8 = vld [vmem:[%s6] ss:$4 sm:%s7]
    %9 = vrot.lane.b32.xlu0 %v8, 96
    %v10 = vpop.permute.xlu0 %9
    %vm11 = vcmask 1048320
    %12 = vst.msk [vmem:[#allocation0] ss:$8 sm:$0x3] %vm11, %v10
    %s13 = scalar_lea.vmem %s0, 2
    %s14 = smov 3
    %v15 = vld [vmem:[%s13] ss:$4 sm:%s14]
    %16 = vrot.lane.b32.xlu0 %v15, 64
    %v17 = vpop.permute.xlu0 %16
    %vm18 = vcmask 785920
    %19 = vst.msk [vmem:[#allocation0] ss:$8 sm:$0x3] %vm18, %v17
    %s20 = scalar_lea.vmem %s0, 1
    %s21 = smov 3
    %v22 = vld [vmem:[%s20] ss:$4 sm:%s21]
    %23 = vrot.lane.b32.xlu0 %v22, 32
    %v24 = vpop.permute.xlu0 %23
    %vm25 = vcmask 523520
    %26 = vst.msk [vmem:[#allocation0] ss:$8 sm:$0x3] %vm25, %v24
    %s28 = sshll.u32 1, 1
    %s29 = ssub.s32 %s28, 1
    %v31 = vld [vmem:[#allocation0] sm:%s29]
    %s32 = sshll.u32 1, 1
    %s33 = ssub.s32 %s32, 1
    %34 = vst [vmem:[%s1] sm:%s33] %v31
    %s35 = scalar_lea.vmem [#allocation0], 8
    %v36 = vld [vmem:[%s35] sm:%s29]
    %s37 = sshll.u32 1, 1
    %s38 = ssub.s32 %s37, 1
    %s39 = scalar_lea.vmem %s1, 1
    %40 = vst [vmem:[%s39] sm:%s38] %v36

// kernel: tile.6
$region0: #{tile.6}
  #allocation0 [shape = 's32[1]{0}', space=sflag, size = 0x4, scoped, tag = 'scoped memory for tile.6']
  %s0 = inlined_call_operand.vmem [shape: f32[32], index: 0, kind: input, shape index: {}]
  %s1 = inlined_call_operand.vmem [shape: f32[8,32], index: 1, kind: output, shape index: {}]
  // Predicated region
  $region2: #{tile.6} parent=0 // pred_check
    _
  $region3: #{tile.6} parent=0 // pred_check_branch
    %3 = sbr.rel (0) target = $region5
  $region4: #{tile.6} parent=0 // pred_region
    _
  $region5: #{tile.6} parent=0 // pred_fallthru
    _
  %v4 = vld [vmem:[%s0] ss:$0 sm:$0xff]
  %5 = vst [vmem:[%s1] sm:$0xff] %v4

// kernel: dqn_forward.1
$region0: #{dqn_forward.1}
  #allocation0 [shape = 'u32[]', space=smem, size = 0x4, offset = 0x4, fixed_abs, tag = 'smem constant byte address 0x4 - core index']
  #allocation1 [shape = 'u32[144,128]{1,0:T(1,128)}', space=vmem, size = 0x12000, scoped, tag = 'internal scratch']
  %s0 = inlined_call_operand.vmem [shape: bf16[1,288,54], index: 0, kind: input, shape index: {}]
  %s1 = inlined_call_operand.vmem [shape: bf16[3,54,64], index: 1, kind: input, shape index: {}]
  %s2 = inlined_call_operand.vmem [shape: f32[1,256], index: 2, kind: input, shape index: {}]
  %s3 = inlined_call_operand.vmem [shape: bf16[256,16], index: 3, kind: input, shape index: {}]
  %s4 = inlined_call_operand.vmem [shape: f32[1,16], index: 4, kind: input, shape index: {}]
  %s5 = inlined_call_operand.vmem [shape: bf16[16,5], index: 5, kind: input, shape index: {}]
  %s6 = inlined_call_operand.vmem [shape: bf16[3,5], index: 6, kind: input, shape index: {}]
  %s7 = inlined_call_operand.vmem [shape: f32[1,5], index: 7, kind: input, shape index: {}]
  %s8 = inlined_call_operand.vmem [shape: bf16[16,3], index: 8, kind: input, shape index: {}]
  %s9 = inlined_call_operand.vmem [shape: f32[16,5], index: 9, kind: output, shape index: {}]
  %s10 = sld [smem:[#allocation0]]
  $region46: #{dqn_forward.1} parent=0
    _
  %s12 = ssub.s32 1, %s10
  %s13 = scalar_select 0, %s12, %s10
  // Predicated region
  $region2: #{dqn_forward.1} parent=0 // pred_check
    _
  $region3: #{dqn_forward.1} parent=0 // pred_check_branch
    %15 = sbr.rel (0) target = $region5
  $region4: #{dqn_forward.1} parent=0 // pred_region
    _
  $region5: #{dqn_forward.1} parent=0 // pred_fallthru
    _
  // Predicated region
  $region6: #{dqn_forward.1} parent=0 // pred_check
    _
  $region7: #{dqn_forward.1} parent=0 // pred_check_branch
    %17 = sbr.rel (0) target = $region9
  $region8: #{dqn_forward.1} parent=0 // pred_region
    _
  $region9: #{dqn_forward.1} parent=0 // pred_fallthru
    _
  // Predicated region
  $region10: #{dqn_forward.1} parent=0 // pred_check
    _
  $region11: #{dqn_forward.1} parent=0 // pred_check_branch
    %19 = sbr.rel (0) target = $region13
  $region12: #{dqn_forward.1} parent=0 // pred_region
    _
  $region13: #{dqn_forward.1} parent=0 // pred_fallthru
    _
  // Predicated region
  $region14: #{dqn_forward.1} parent=0 // pred_check
    _
  $region15: #{dqn_forward.1} parent=0 // pred_check_branch
    %21 = sbr.rel (0) target = $region17
  $region16: #{dqn_forward.1} parent=0 // pred_region
    _
  $region17: #{dqn_forward.1} parent=0 // pred_fallthru
    _
  // Predicated region
  $region18: #{dqn_forward.1} parent=0 // pred_check
    _
  $region19: #{dqn_forward.1} parent=0 // pred_check_branch
    %23 = sbr.rel (0) target = $region21
  $region20: #{dqn_forward.1} parent=0 // pred_region
    _
  $region21: #{dqn_forward.1} parent=0 // pred_fallthru
    _
  // Predicated region
  $region22: #{dqn_forward.1} parent=0 // pred_check
    _
  $region23: #{dqn_forward.1} parent=0 // pred_check_branch
    %25 = sbr.rel (0) target = $region25
  $region24: #{dqn_forward.1} parent=0 // pred_region
    _
  $region25: #{dqn_forward.1} parent=0 // pred_fallthru
    _
  // Predicated region
  $region26: #{dqn_forward.1} parent=0 // pred_check
    _
  $region27: #{dqn_forward.1} parent=0 // pred_check_branch
    %27 = sbr.rel (0) target = $region29
  $region28: #{dqn_forward.1} parent=0 // pred_region
    _
  $region29: #{dqn_forward.1} parent=0 // pred_fallthru
    _
  // Predicated region
  $region30: #{dqn_forward.1} parent=0 // pred_check
    _
  $region31: #{dqn_forward.1} parent=0 // pred_check_branch
    %29 = sbr.rel (0) target = $region33
  $region32: #{dqn_forward.1} parent=0 // pred_region
    _
  $region33: #{dqn_forward.1} parent=0 // pred_fallthru
    _
  // Predicated region
  $region34: #{dqn_forward.1} parent=0 // pred_check
    _
  $region35: #{dqn_forward.1} parent=0 // pred_check_branch
    %31 = sbr.rel (0) target = $region37
  $region36: #{dqn_forward.1} parent=0 // pred_region
    _
  $region37: #{dqn_forward.1} parent=0 // pred_fallthru
    _
  %v33 = vld [vmem:[%s0] sm:$0xf]
  %v34 = vld [vmem:[%s0 + $0x4] sm:$0xf]
  %v35 = vld [vmem:[%s0 + $0x8] sm:$0xf]
  %v36 = vld [vmem:[%s0 + $0xc] sm:$0xf]
  %v37 = vld [vmem:[%s0 + $0x10] sm:$0xf]
  %v38 = vld [vmem:[%s0 + $0x14] sm:$0xf]
  %v39 = vld [vmem:[%s0 + $0x18] sm:$0xf]
  %v40 = vld [vmem:[%s0 + $0x1c] sm:$0xf]
  %v41 = vld [vmem:[%s0 + $0x20] sm:$0xf]
  %v42 = vld [vmem:[%s0 + $0x24] sm:$0xf]
  %v43 = vld [vmem:[%s0 + $0x28] sm:$0xf]
  %v44 = vld [vmem:[%s0 + $0x2c] sm:$0xf]
  %v45 = vld [vmem:[%s0 + $0x30] sm:$0xf]
  %v46 = vld [vmem:[%s0 + $0x34] sm:$0xf]
  %v47 = vld [vmem:[%s0 + $0x38] sm:$0xf]
  %v48 = vld [vmem:[%s0 + $0x3c] sm:$0xf]
  %v49 = vld [vmem:[%s0 + $0x40] sm:$0xf]
  %v50 = vld [vmem:[%s0 + $0x44] sm:$0xf]
  %v51 = vld [vmem:[%s0 + $0x48] sm:$0xf]
  %v52 = vld [vmem:[%s0 + $0x4c] sm:$0xf]
  %v53 = vld [vmem:[%s0 + $0x50] sm:$0xf]
  %v54 = vld [vmem:[%s0 + $0x54] sm:$0xf]
  %v55 = vld [vmem:[%s0 + $0x58] sm:$0xf]
  %v56 = vld [vmem:[%s0 + $0x5c] sm:$0xf]
  %v57 = vld [vmem:[%s0 + $0x60] sm:$0xf]
  %v58 = vld [vmem:[%s0 + $0x64] sm:$0xf]
  %v59 = vld [vmem:[%s0 + $0x68] sm:$0xf]
  %v60 = vld [vmem:[%s0 + $0x6c] sm:$0xf]
  %v61 = vld [vmem:[%s0 + $0x70] sm:$0xf]
  %v62 = vld [vmem:[%s0 + $0x74] sm:$0xf]
  %v63 = vld [vmem:[%s0 + $0x78] sm:$0xf]
  %v64 = vld [vmem:[%s0 + $0x7c] sm:$0xf]
  %v65 = vld [vmem:[%s0 + $0x80] sm:$0xf]
  %v66 = vld [vmem:[%s0 + $0x84] sm:$0xf]
  %v67 = vld [vmem:[%s0 + $0x88] sm:$0xf]
  %v68 = vld [vmem:[%s0 + $0x8c] sm:$0xf]
  %v69 = vld [vmem:[%s1] sm:$0xf]
  %v70 = vld [vmem:[%s1 + $0x4] sm:$0xf]
  %v71 = vld [vmem:[%s1 + $0x8] sm:$0xf]
  %v72 = vld [vmem:[%s1 + $0xc] sm:$0xf]
  %v73 = vld [vmem:[%s1 + $0x10] sm:$0xf]
  %v74 = vld [vmem:[%s1 + $0x14] sm:$0xf]
  %v75 = vld [vmem:[%s1 + $0x18] sm:$0x7]
  %s76 = scalar_lea.vmem %s1, 28
  %v77 = vld [vmem:[%s76] sm:$0xf]
  %v78 = vld [vmem:[%s76 + $0x4] sm:$0xf]
  %v79 = vld [vmem:[%s76 + $0x8] sm:$0xf]
  %v80 = vld [vmem:[%s76 + $0xc] sm:$0xf]
  %v81 = vld [vmem:[%s76 + $0x10] sm:$0xf]
  %v82 = vld [vmem:[%s76 + $0x14] sm:$0xf]
  %v83 = vld [vmem:[%s76 + $0x18] sm:$0x7]
  %v116 = vunpack.c.l.b16 %v35
  %v117 = vunpack.c.l.b16 %v36
  %v118 = vunpack.c.l.b16 %v37
  %v119 = vunpack.c.l.b16 %v38
  %v120 = vunpack.c.l.b16 %v39
  %v121 = vunpack.c.l.b16 %v40
  %v122 = vunpack.c.l.b16 %v41
  %v123 = vunpack.c.l.b16 %v42
  %v124 = vunpack.c.l.b16 %v43
  %v125 = vunpack.c.l.b16 %v44
  %v126 = vunpack.c.l.b16 %v45
  %v127 = vunpack.c.l.b16 %v46
  %v128 = vunpack.c.l.b16 %v47
  %v129 = vunpack.c.l.b16 %v48
  %v130 = vunpack.c.l.b16 %v49
  %v131 = vunpack.c.l.b16 %v50
  %v132 = vunpack.c.l.b16 %v51
  %v133 = vunpack.c.l.b16 %v52
  %v134 = vunpack.c.l.b16 %v53
  %v135 = vunpack.c.l.b16 %v54
  %v136 = vunpack.c.l.b16 %v55
  %v137 = vunpack.c.l.b16 %v56
  %v138 = vunpack.c.l.b16 %v57
  %v139 = vunpack.c.l.b16 %v58
  %v140 = vunpack.c.l.b16 %v59
  %v141 = vunpack.c.l.b16 %v60
  %v142 = vunpack.c.l.b16 %v61
  %v143 = vunpack.c.l.b16 %v62
  %v144 = vunpack.c.l.b16 %v63
  %v145 = vunpack.c.l.b16 %v64
  %v146 = vunpack.c.l.b16 %v65
  %v147 = vunpack.c.l.b16 %v66
  %v148 = vpack.c.b16 %v117, %v116
  %v149 = vpack.c.b16 %v119, %v118
  %v150 = vpack.c.b16 %v121, %v120
  %v151 = vpack.c.b16 %v123, %v122
  %v152 = vpack.c.b16 %v125, %v124
  %v153 = vpack.c.b16 %v127, %v126
  %v154 = vpack.c.b16 %v129, %v128
  %v155 = vpack.c.b16 %v131, %v130
  %v156 = vpack.c.b16 %v133, %v132
  %v157 = vpack.c.b16 %v135, %v134
  %v158 = vpack.c.b16 %v137, %v136
  %v159 = vpack.c.b16 %v139, %v138
  %v160 = vpack.c.b16 %v141, %v140
  %v161 = vpack.c.b16 %v143, %v142
  %v162 = vpack.c.b16 %v145, %v144
  %v163 = vpack.c.b16 %v147, %v146
  %v171 = vunpack.c.l.b16 %v77
  %v172 = vunpack.c.l.b16 %v78
  %v173 = vunpack.c.l.b16 %v79
  %v174 = vunpack.c.l.b16 %v80
  %v175 = vunpack.c.l.b16 %v81
  %v176 = vunpack.c.l.b16 %v82
  %v177 = vunpack.c.l.b16 %v83
  %v178 = vpack.c.b16 %v172, %v171
  %v179 = vpack.c.b16 %v174, %v173
  %v180 = vpack.c.b16 %v176, %v175
  %v181 = vpack.c.b16 %v177, %v177
  %vm185 = vcmask 441344
  %v187 = vsel %vm185, %v148, 0
  %v190 = vsel %vm185, %v149, 0
  %v193 = vsel %vm185, %v150, 0
  %v196 = vsel %vm185, %v151, 0
  %v199 = vsel %vm185, %v152, 0
  %v202 = vsel %vm185, %v153, 0
  %v205 = vsel %vm185, %v154, 0
  %v208 = vsel %vm185, %v155, 0
  %v211 = vsel %vm185, %v156, 0
  %v214 = vsel %vm185, %v157, 0
  %v217 = vsel %vm185, %v158, 0
  %v220 = vsel %vm185, %v159, 0
  %v223 = vsel %vm185, %v160, 0
  %v226 = vsel %vm185, %v161, 0
  %v229 = vsel %vm185, %v162, 0
  %v232 = vsel %vm185, %v163, 0
  %vm234 = vcmask 1042432
  %v236 = vsel %vm234, %v181, 0
  %238 = vmatprep.subr.bf16.mxu0 0
  %239 = vmatpush1.bf16.msra.mxu0 0
  %240 = vmatprep.subr.bf16.mxu0 0
  %241 = vmatpush1.bf16.msra.mxu0 0
  %242 = vmatprep.subr.bf16.mxu0 0
  %243 = vmatpush1.bf16.msra.mxu0 0
  %244 = vmatprep.subr.bf16.mxu0 0
  %245 = vmatpush1.bf16.msra.mxu0 0
  %246 = vmatprep.subr.bf16.mxu0 0
  %247 = vmatpush1.bf16.msra.mxu0 %v236
  %248 = vmatprep.subr.bf16.mxu0 0
  %249 = vmatpush1.bf16.msra.mxu0 %v180
  %250 = vmatprep.subr.bf16.mxu0 0
  %251 = vmatpush1.bf16.msra.mxu0 %v179
  %252 = vmatprep.subr.bf16.mxu0 0
  %253 = vmatpush1.bf16.msra.mxu0 %v178
  %254 = vmatprep.subr.bf16.mxu0 0
  %255 = vmatpush2.bf16.msra.mxu0 0
  %256 = vmatprep.subr.bf16.mxu0 0
  %257 = vmatpush2.bf16.msra.mxu0 0
  %258 = vmatprep.subr.bf16.mxu0 0
  %259 = vmatpush2.bf16.msra.mxu0 0
  %260 = vmatprep.subr.bf16.mxu0 0
  %261 = vmatpush2.bf16.msra.mxu0 0
  %262 = vmatprep.subr.bf16.mxu0 0
  %263 = vmatpush2.bf16.msra.mxu0 0
  %264 = vmatprep.subr.bf16.mxu0 0
  %265 = vmatpush2.bf16.msra.mxu0 0
  %266 = vmatprep.subr.bf16.mxu0 0
  %267 = vmatpush2.bf16.msra.mxu0 0
  %268 = vmatprep.subr.bf16.mxu0 0
  %269 = vmatpush2.bf16.msra.mxu0 0
  %270 = vmatprep.mubr.bf16.mxu0 0
  %271 = vmatmul.mubr.bf16.gmra.mxu0 %v187
  %v272 = vpop.f32.mrf.mxu0
  %v273 = vadd.f32 0.0, %v272
  %v274 = vpop.f32.mrf.mxu0
  %v275 = vpop.f32.mrf.mxu0
  %v276 = vadd.f32 0.0, %v275
  %v277 = vpop.f32.mrf.mxu0
  %278 = vmatprep.mubr.bf16.mxu0 0
  %279 = vmatmul.mubr.bf16.gmra.mxu0 %v190
  %v280 = vpop.f32.mrf.mxu0
  %v281 = vadd.f32 0.0, %v280
  %v282 = vpop.f32.mrf.mxu0
  %v283 = vpop.f32.mrf.mxu0
  %v284 = vadd.f32 0.0, %v283
  %v285 = vpop.f32.mrf.mxu0
  %286 = vmatprep.mubr.bf16.mxu0 0
  %287 = vmatmul.mubr.bf16.gmra.mxu0 %v193
  %v288 = vpop.f32.mrf.mxu0
  %v289 = vadd.f32 0.0, %v288
  %v290 = vpop.f32.mrf.mxu0
  %v291 = vpop.f32.mrf.mxu0
  %v292 = vadd.f32 0.0, %v291
  %v293 = vpop.f32.mrf.mxu0
  %294 = vmatprep.mubr.bf16.mxu0 0
  %295 = vmatmul.mubr.bf16.gmra.mxu0 %v196
  %v296 = vpop.f32.mrf.mxu0
  %v297 = vadd.f32 0.0, %v296
  %v298 = vpop.f32.mrf.mxu0
  %v299 = vpop.f32.mrf.mxu0
  %v300 = vadd.f32 0.0, %v299
  %v301 = vpop.f32.mrf.mxu0
  %302 = vmatprep.mubr.bf16.mxu0 0
  %303 = vmatmul.mubr.bf16.gmra.mxu0 %v199
  %v304 = vpop.f32.mrf.mxu0
  %v305 = vadd.f32 0.0, %v304
  %v306 = vpop.f32.mrf.mxu0
  %v307 = vpop.f32.mrf.mxu0
  %v308 = vadd.f32 0.0, %v307
  %v309 = vpop.f32.mrf.mxu0
  %310 = vmatprep.mubr.bf16.mxu0 0
  %311 = vmatmul.mubr.bf16.gmra.mxu0 %v202
  %v312 = vpop.f32.mrf.mxu0
  %v313 = vadd.f32 0.0, %v312
  %v314 = vpop.f32.mrf.mxu0
  %v315 = vpop.f32.mrf.mxu0
  %v316 = vadd.f32 0.0, %v315
  %v317 = vpop.f32.mrf.mxu0
  %318 = vmatprep.mubr.bf16.mxu0 0
  %319 = vmatmul.mubr.bf16.gmra.mxu0 %v205
  %v320 = vpop.f32.mrf.mxu0
  %v321 = vadd.f32 0.0, %v320
  %v322 = vpop.f32.mrf.mxu0
  %v323 = vpop.f32.mrf.mxu0
  %v324 = vadd.f32 0.0, %v323
  %v325 = vpop.f32.mrf.mxu0
  %326 = vmatprep.mubr.bf16.mxu0 0
  %327 = vmatmul.mubr.bf16.gmra.mxu0 %v208
  %v328 = vpop.f32.mrf.mxu0
  %v329 = vadd.f32 0.0, %v328
  %v330 = vpop.f32.mrf.mxu0
  %v331 = vpop.f32.mrf.mxu0
  %v332 = vadd.f32 0.0, %v331
  %v333 = vpop.f32.mrf.mxu0
  %334 = vmatprep.mubr.bf16.mxu0 0
  %335 = vmatmul.mubr.bf16.gmra.mxu0 %v211
  %v336 = vpop.f32.mrf.mxu0
  %v337 = vadd.f32 0.0, %v336
  %v338 = vpop.f32.mrf.mxu0
  %v339 = vpop.f32.mrf.mxu0
  %v340 = vadd.f32 0.0, %v339
  %v341 = vpop.f32.mrf.mxu0
  %342 = vmatprep.mubr.bf16.mxu0 0
  %343 = vmatmul.mubr.bf16.gmra.mxu0 %v214
  %v344 = vpop.f32.mrf.mxu0
  %v345 = vadd.f32 0.0, %v344
  %v346 = vpop.f32.mrf.mxu0
  %v347 = vpop.f32.mrf.mxu0
  %v348 = vadd.f32 0.0, %v347
  %v349 = vpop.f32.mrf.mxu0
  %350 = vmatprep.mubr.bf16.mxu0 0
  %351 = vmatmul.mubr.bf16.gmra.mxu0 %v217
  %v352 = vpop.f32.mrf.mxu0
  %v353 = vadd.f32 0.0, %v352
  %v354 = vpop.f32.mrf.mxu0
  %v355 = vpop.f32.mrf.mxu0
  %v356 = vadd.f32 0.0, %v355
  %v357 = vpop.f32.mrf.mxu0
  %358 = vmatprep.mubr.bf16.mxu0 0
  %359 = vmatmul.mubr.bf16.gmra.mxu0 %v220
  %v360 = vpop.f32.mrf.mxu0
  %v361 = vadd.f32 0.0, %v360
  %v362 = vpop.f32.mrf.mxu0
  %v363 = vpop.f32.mrf.mxu0
  %v364 = vadd.f32 0.0, %v363
  %v365 = vpop.f32.mrf.mxu0
  %366 = vmatprep.mubr.bf16.mxu0 0
  %367 = vmatmul.mubr.bf16.gmra.mxu0 %v223
  %v368 = vpop.f32.mrf.mxu0
  %v369 = vadd.f32 0.0, %v368
  %v370 = vpop.f32.mrf.mxu0
  %v371 = vpop.f32.mrf.mxu0
  %v372 = vadd.f32 0.0, %v371
  %v373 = vpop.f32.mrf.mxu0
  %374 = vmatprep.mubr.bf16.mxu0 0
  %375 = vmatmul.mubr.bf16.gmra.mxu0 %v226
  %v376 = vpop.f32.mrf.mxu0
  %v377 = vadd.f32 0.0, %v376
  %v378 = vpop.f32.mrf.mxu0
  %v379 = vpop.f32.mrf.mxu0
  %v380 = vadd.f32 0.0, %v379
  %v381 = vpop.f32.mrf.mxu0
  %382 = vmatprep.mubr.bf16.mxu0 0
  %383 = vmatmul.mubr.bf16.gmra.mxu0 %v229
  %v384 = vpop.f32.mrf.mxu0
  %v385 = vadd.f32 0.0, %v384
  %v386 = vpop.f32.mrf.mxu0
  %v387 = vpop.f32.mrf.mxu0
  %v388 = vadd.f32 0.0, %v387
  %v389 = vpop.f32.mrf.mxu0
  %390 = vmatprep.mubr.bf16.mxu0 0
  %391 = vmatmul.mubr.bf16.gmra.mxu0 %v232
  %v392 = vpop.f32.mrf.mxu0
  %v393 = vadd.f32 0.0, %v392
  %v394 = vpop.f32.mrf.mxu0
  %v395 = vpop.f32.mrf.mxu0
  %v396 = vadd.f32 0.0, %v395
  %v397 = vpop.f32.mrf.mxu0
  %398 = vdwg.mxu0
  %v401 = vunpack.c.l.b16 %v33
  %v402 = vunpack.c.l.b16 %v34
  %v403 = vpack.c.b16 %v402, %v401
  %v411 = vunpack.c.l.b16 %v69
  %v412 = vunpack.c.l.b16 %v70
  %v413 = vunpack.c.l.b16 %v71
  %v414 = vunpack.c.l.b16 %v72
  %v415 = vunpack.c.l.b16 %v73
  %v416 = vunpack.c.l.b16 %v74
  %v417 = vunpack.c.l.b16 %v75
  %v418 = vpack.c.b16 %v412, %v411
  %v419 = vpack.c.b16 %v414, %v413
  %v420 = vpack.c.b16 %v416, %v415
  %v421 = vpack.c.b16 %v417, %v417
  %v426 = vsel %vm185, %v403, 0
  %v429 = vsel %vm234, %v421, 0
  %431 = vmatprep.subr.bf16.mxu0 0
  %432 = vmatpush1.bf16.msra.mxu0 0
  %433 = vmatprep.subr.bf16.mxu0 0
  %434 = vmatpush1.bf16.msra.mxu0 0
  %435 = vmatprep.subr.bf16.mxu0 0
  %436 = vmatpush1.bf16.msra.mxu0 0
  %437 = vmatprep.subr.bf16.mxu0 0
  %438 = vmatpush1.bf16.msra.mxu0 0
  %439 = vmatprep.subr.bf16.mxu0 0
  %440 = vmatpush1.bf16.msra.mxu0 %v429
  %441 = vmatprep.subr.bf16.mxu0 0
  %442 = vmatpush1.bf16.msra.mxu0 %v420
  %443 = vmatprep.subr.bf16.mxu0 0
  %444 = vmatpush1.bf16.msra.mxu0 %v419
  %445 = vmatprep.subr.bf16.mxu0 0
  %446 = vmatpush1.bf16.msra.mxu0 %v418
  %447 = vmatprep.subr.bf16.mxu0 0
  %448 = vmatpush2.bf16.msra.mxu0 0
  %449 = vmatprep.subr.bf16.mxu0 0
  %450 = vmatpush2.bf16.msra.mxu0 0
  %451 = vmatprep.subr.bf16.mxu0 0
  %452 = vmatpush2.bf16.msra.mxu0 0
  %453 = vmatprep.subr.bf16.mxu0 0
  %454 = vmatpush2.bf16.msra.mxu0 0
  %455 = vmatprep.subr.bf16.mxu0 0
  %456 = vmatpush2.bf16.msra.mxu0 0
  %457 = vmatprep.subr.bf16.mxu0 0
  %458 = vmatpush2.bf16.msra.mxu0 0
  %459 = vmatprep.subr.bf16.mxu0 0
  %460 = vmatpush2.bf16.msra.mxu0 0
  %461 = vmatprep.subr.bf16.mxu0 0
  %462 = vmatpush2.bf16.msra.mxu0 0
  %463 = vmatprep.mubr.bf16.mxu0 0
  %464 = vmatmul.mubr.bf16.gmra.mxu0 %v426
  %v465 = vpop.f32.mrf.mxu0
  %v466 = vadd.f32 %v273, %v465
  %v467 = vpop.f32.mrf.mxu0
  %v468 = vpop.f32.mrf.mxu0
  %v469 = vadd.f32 %v276, %v468
  %v470 = vpop.f32.mrf.mxu0
  %471 = vmatprep.mubr.bf16.mxu0 0
  %472 = vmatmul.mubr.bf16.gmra.mxu0 %v187
  %v473 = vpop.f32.mrf.mxu0
  %v474 = vadd.f32 %v281, %v473
  %v475 = vpop.f32.mrf.mxu0
  %v476 = vpop.f32.mrf.mxu0
  %v477 = vadd.f32 %v284, %v476
  %v478 = vpop.f32.mrf.mxu0
  %479 = vmatprep.mubr.bf16.mxu0 0
  %480 = vmatmul.mubr.bf16.gmra.mxu0 %v190
  %v481 = vpop.f32.mrf.mxu0
  %v482 = vadd.f32 %v289, %v481
  %v483 = vpop.f32.mrf.mxu0
  %v484 = vpop.f32.mrf.mxu0
  %v485 = vadd.f32 %v292, %v484
  %v486 = vpop.f32.mrf.mxu0
  %487 = vmatprep.mubr.bf16.mxu0 0
  %488 = vmatmul.mubr.bf16.gmra.mxu0 %v193
  %v489 = vpop.f32.mrf.mxu0
  %v490 = vadd.f32 %v297, %v489
  %v491 = vpop.f32.mrf.mxu0
  %v492 = vpop.f32.mrf.mxu0
  %v493 = vadd.f32 %v300, %v492
  %v494 = vpop.f32.mrf.mxu0
  %495 = vmatprep.mubr.bf16.mxu0 0
  %496 = vmatmul.mubr.bf16.gmra.mxu0 %v196
  %v497 = vpop.f32.mrf.mxu0
  %v498 = vadd.f32 %v305, %v497
  %v499 = vpop.f32.mrf.mxu0
  %v500 = vpop.f32.mrf.mxu0
  %v501 = vadd.f32 %v308, %v500
  %v502 = vpop.f32.mrf.mxu0
  %503 = vmatprep.mubr.bf16.mxu0 0
  %504 = vmatmul.mubr.bf16.gmra.mxu0 %v199
  %v505 = vpop.f32.mrf.mxu0
  %v506 = vadd.f32 %v313, %v505
  %v507 = vpop.f32.mrf.mxu0
  %v508 = vpop.f32.mrf.mxu0
  %v509 = vadd.f32 %v316, %v508
  %v510 = vpop.f32.mrf.mxu0
  %511 = vmatprep.mubr.bf16.mxu0 0
  %512 = vmatmul.mubr.bf16.gmra.mxu0 %v202
  %v513 = vpop.f32.mrf.mxu0
  %v514 = vadd.f32 %v321, %v513
  %v515 = vpop.f32.mrf.mxu0
  %v516 = vpop.f32.mrf.mxu0
  %v517 = vadd.f32 %v324, %v516
  %v518 = vpop.f32.mrf.mxu0
  %519 = vmatprep.mubr.bf16.mxu0 0
  %520 = vmatmul.mubr.bf16.gmra.mxu0 %v205
  %v521 = vpop.f32.mrf.mxu0
  %v522 = vadd.f32 %v329, %v521
  %v523 = vpop.f32.mrf.mxu0
  %v524 = vpop.f32.mrf.mxu0
  %v525 = vadd.f32 %v332, %v524
  %v526 = vpop.f32.mrf.mxu0
  %527 = vmatprep.mubr.bf16.mxu0 0
  %528 = vmatmul.mubr.bf16.gmra.mxu0 %v208
  %v529 = vpop.f32.mrf.mxu0
  %v530 = vadd.f32 %v337, %v529
  %v531 = vpop.f32.mrf.mxu0
  %v532 = vpop.f32.mrf.mxu0
  %v533 = vadd.f32 %v340, %v532
  %v534 = vpop.f32.mrf.mxu0
  %535 = vmatprep.mubr.bf16.mxu0 0
  %536 = vmatmul.mubr.bf16.gmra.mxu0 %v211
  %v537 = vpop.f32.mrf.mxu0
  %v538 = vadd.f32 %v345, %v537
  %v539 = vpop.f32.mrf.mxu0
  %v540 = vpop.f32.mrf.mxu0
  %v541 = vadd.f32 %v348, %v540
  %v542 = vpop.f32.mrf.mxu0
  %543 = vmatprep.mubr.bf16.mxu0 0
  %544 = vmatmul.mubr.bf16.gmra.mxu0 %v214
  %v545 = vpop.f32.mrf.mxu0
  %v546 = vadd.f32 %v353, %v545
  %v547 = vpop.f32.mrf.mxu0
  %v548 = vpop.f32.mrf.mxu0
  %v549 = vadd.f32 %v356, %v548
  %v550 = vpop.f32.mrf.mxu0
  %551 = vmatprep.mubr.bf16.mxu0 0
  %552 = vmatmul.mubr.bf16.gmra.mxu0 %v217
  %v553 = vpop.f32.mrf.mxu0
  %v554 = vadd.f32 %v361, %v553
  %v555 = vpop.f32.mrf.mxu0
  %v556 = vpop.f32.mrf.mxu0
  %v557 = vadd.f32 %v364, %v556
  %v558 = vpop.f32.mrf.mxu0
  %559 = vmatprep.mubr.bf16.mxu0 0
  %560 = vmatmul.mubr.bf16.gmra.mxu0 %v220
  %v561 = vpop.f32.mrf.mxu0
  %v562 = vadd.f32 %v369, %v561
  %v563 = vpop.f32.mrf.mxu0
  %v564 = vpop.f32.mrf.mxu0
  %v565 = vadd.f32 %v372, %v564
  %v566 = vpop.f32.mrf.mxu0
  %567 = vmatprep.mubr.bf16.mxu0 0
  %568 = vmatmul.mubr.bf16.gmra.mxu0 %v223
  %v569 = vpop.f32.mrf.mxu0
  %v570 = vadd.f32 %v377, %v569
  %v571 = vpop.f32.mrf.mxu0
  %v572 = vpop.f32.mrf.mxu0
  %v573 = vadd.f32 %v380, %v572
  %v574 = vpop.f32.mrf.mxu0
  %575 = vmatprep.mubr.bf16.mxu0 0
  %576 = vmatmul.mubr.bf16.gmra.mxu0 %v226
  %v577 = vpop.f32.mrf.mxu0
  %v578 = vadd.f32 %v385, %v577
  %v579 = vpop.f32.mrf.mxu0
  %v580 = vpop.f32.mrf.mxu0
  %v581 = vadd.f32 %v388, %v580
  %v582 = vpop.f32.mrf.mxu0
  %583 = vmatprep.mubr.bf16.mxu0 0
  %584 = vmatmul.mubr.bf16.gmra.mxu0 %v229
  %v585 = vpop.f32.mrf.mxu0
  %v586 = vadd.f32 %v393, %v585
  %v587 = vpop.f32.mrf.mxu0
  %v588 = vpop.f32.mrf.mxu0
  %v589 = vadd.f32 %v396, %v588
  %v590 = vpop.f32.mrf.mxu0
  %591 = vdwg.mxu0
  %s592 = scalar_lea.vmem %s1, 56
  %v593 = vld [vmem:[%s592] sm:$0xf]
  %v594 = vld [vmem:[%s592 + $0x4] sm:$0xf]
  %v595 = vld [vmem:[%s592 + $0x8] sm:$0xf]
  %v596 = vld [vmem:[%s592 + $0xc] sm:$0xf]
  %v597 = vld [vmem:[%s592 + $0x10] sm:$0xf]
  %v598 = vld [vmem:[%s592 + $0x14] sm:$0xf]
  %v599 = vld [vmem:[%s592 + $0x18] sm:$0x7]
  %v602 = vunpack.c.l.b16 %v67
  %v603 = vunpack.c.l.b16 %v68
  %v604 = vpack.c.b16 %v603, %v602
  %v612 = vunpack.c.l.b16 %v593
  %v613 = vunpack.c.l.b16 %v594
  %v614 = vunpack.c.l.b16 %v595
  %v615 = vunpack.c.l.b16 %v596
  %v616 = vunpack.c.l.b16 %v597
  %v617 = vunpack.c.l.b16 %v598
  %v618 = vunpack.c.l.b16 %v599
  %v619 = vpack.c.b16 %v613, %v612
  %v620 = vpack.c.b16 %v615, %v614
  %v621 = vpack.c.b16 %v617, %v616
  %v622 = vpack.c.b16 %v618, %v618
  %v627 = vsel %vm185, %v604, 0
  %v630 = vsel %vm234, %v622, 0
  %632 = vmatprep.subr.bf16.mxu0 0
  %633 = vmatpush1.bf16.msra.mxu0 0
  %634 = vmatprep.subr.bf16.mxu0 0
  %635 = vmatpush1.bf16.msra.mxu0 0
  %636 = vmatprep.subr.bf16.mxu0 0
  %637 = vmatpush1.bf16.msra.mxu0 0
  %638 = vmatprep.subr.bf16.mxu0 0
  %639 = vmatpush1.bf16.msra.mxu0 0
  %640 = vmatprep.subr.bf16.mxu0 0
  %641 = vmatpush1.bf16.msra.mxu0 %v630
  %642 = vmatprep.subr.bf16.mxu0 0
  %643 = vmatpush1.bf16.msra.mxu0 %v621
  %644 = vmatprep.subr.bf16.mxu0 0
  %645 = vmatpush1.bf16.msra.mxu0 %v620
  %646 = vmatprep.subr.bf16.mxu0 0
  %647 = vmatpush1.bf16.msra.mxu0 %v619
  %648 = vmatprep.subr.bf16.mxu0 0
  %649 = vmatpush2.bf16.msra.mxu0 0
  %650 = vmatprep.subr.bf16.mxu0 0
  %651 = vmatpush2.bf16.msra.mxu0 0
  %652 = vmatprep.subr.bf16.mxu0 0
  %653 = vmatpush2.bf16.msra.mxu0 0
  %654 = vmatprep.subr.bf16.mxu0 0
  %655 = vmatpush2.bf16.msra.mxu0 0
  %656 = vmatprep.subr.bf16.mxu0 0
  %657 = vmatpush2.bf16.msra.mxu0 0
  %658 = vmatprep.subr.bf16.mxu0 0
  %659 = vmatpush2.bf16.msra.mxu0 0
  %660 = vmatprep.subr.bf16.mxu0 0
  %661 = vmatpush2.bf16.msra.mxu0 0
  %662 = vmatprep.subr.bf16.mxu0 0
  %663 = vmatpush2.bf16.msra.mxu0 0
  %664 = vmatprep.mubr.bf16.mxu0 0
  %665 = vmatmul.mubr.bf16.gmra.mxu0 %v190
  %v666 = vpop.f32.mrf.mxu0
  %v667 = vadd.f32 0.0, %v666
  %v668 = vpop.f32.mrf.mxu0
  %v669 = vpop.f32.mrf.mxu0
  %v670 = vadd.f32 0.0, %v669
  %v671 = vpop.f32.mrf.mxu0
  %672 = vmatprep.mubr.bf16.mxu0 0
  %673 = vmatmul.mubr.bf16.gmra.mxu0 %v193
  %v674 = vpop.f32.mrf.mxu0
  %v675 = vadd.f32 0.0, %v674
  %v676 = vpop.f32.mrf.mxu0
  %v677 = vpop.f32.mrf.mxu0
  %v678 = vadd.f32 0.0, %v677
  %v679 = vpop.f32.mrf.mxu0
  %680 = vmatprep.mubr.bf16.mxu0 0
  %681 = vmatmul.mubr.bf16.gmra.mxu0 %v196
  %v682 = vpop.f32.mrf.mxu0
  %v683 = vadd.f32 0.0, %v682
  %v684 = vpop.f32.mrf.mxu0
  %v685 = vpop.f32.mrf.mxu0
  %v686 = vadd.f32 0.0, %v685
  %v687 = vpop.f32.mrf.mxu0
  %688 = vmatprep.mubr.bf16.mxu0 0
  %689 = vmatmul.mubr.bf16.gmra.mxu0 %v199
  %v690 = vpop.f32.mrf.mxu0
  %v691 = vadd.f32 0.0, %v690
  %v692 = vpop.f32.mrf.mxu0
  %v693 = vpop.f32.mrf.mxu0
  %v694 = vadd.f32 0.0, %v693
  %v695 = vpop.f32.mrf.mxu0
  %696 = vmatprep.mubr.bf16.mxu0 0
  %697 = vmatmul.mubr.bf16.gmra.mxu0 %v202
  %v698 = vpop.f32.mrf.mxu0
  %v699 = vadd.f32 0.0, %v698
  %v700 = vpop.f32.mrf.mxu0
  %v701 = vpop.f32.mrf.mxu0
  %v702 = vadd.f32 0.0, %v701
  %v703 = vpop.f32.mrf.mxu0
  %704 = vmatprep.mubr.bf16.mxu0 0
  %705 = vmatmul.mubr.bf16.gmra.mxu0 %v205
  %v706 = vpop.f32.mrf.mxu0
  %v707 = vadd.f32 0.0, %v706
  %v708 = vpop.f32.mrf.mxu0
  %v709 = vpop.f32.mrf.mxu0
  %v710 = vadd.f32 0.0, %v709
  %v711 = vpop.f32.mrf.mxu0
  %712 = vmatprep.mubr.bf16.mxu0 0
  %713 = vmatmul.mubr.bf16.gmra.mxu0 %v208
  %v714 = vpop.f32.mrf.mxu0
  %v715 = vadd.f32 0.0, %v714
  %v716 = vpop.f32.mrf.mxu0
  %v717 = vpop.f32.mrf.mxu0
  %v718 = vadd.f32 0.0, %v717
  %v719 = vpop.f32.mrf.mxu0
  %720 = vmatprep.mubr.bf16.mxu0 0
  %721 = vmatmul.mubr.bf16.gmra.mxu0 %v211
  %v722 = vpop.f32.mrf.mxu0
  %v723 = vadd.f32 0.0, %v722
  %v724 = vpop.f32.mrf.mxu0
  %v725 = vpop.f32.mrf.mxu0
  %v726 = vadd.f32 0.0, %v725
  %v727 = vpop.f32.mrf.mxu0
  %728 = vmatprep.mubr.bf16.mxu0 0
  %729 = vmatmul.mubr.bf16.gmra.mxu0 %v214
  %v730 = vpop.f32.mrf.mxu0
  %v731 = vadd.f32 0.0, %v730
  %v732 = vpop.f32.mrf.mxu0
  %v733 = vpop.f32.mrf.mxu0
  %v734 = vadd.f32 0.0, %v733
  %v735 = vpop.f32.mrf.mxu0
  %736 = vmatprep.mubr.bf16.mxu0 0
  %737 = vmatmul.mubr.bf16.gmra.mxu0 %v217
  %v738 = vpop.f32.mrf.mxu0
  %v739 = vadd.f32 0.0, %v738
  %v740 = vpop.f32.mrf.mxu0
  %v741 = vpop.f32.mrf.mxu0
  %v742 = vadd.f32 0.0, %v741
  %v743 = vpop.f32.mrf.mxu0
  %744 = vmatprep.mubr.bf16.mxu0 0
  %745 = vmatmul.mubr.bf16.gmra.mxu0 %v220
  %v746 = vpop.f32.mrf.mxu0
  %v747 = vadd.f32 0.0, %v746
  %v748 = vpop.f32.mrf.mxu0
  %v749 = vpop.f32.mrf.mxu0
  %v750 = vadd.f32 0.0, %v749
  %v751 = vpop.f32.mrf.mxu0
  %752 = vmatprep.mubr.bf16.mxu0 0
  %753 = vmatmul.mubr.bf16.gmra.mxu0 %v223
  %v754 = vpop.f32.mrf.mxu0
  %v755 = vadd.f32 0.0, %v754
  %v756 = vpop.f32.mrf.mxu0
  %v757 = vpop.f32.mrf.mxu0
  %v758 = vadd.f32 0.0, %v757
  %v759 = vpop.f32.mrf.mxu0
  %760 = vmatprep.mubr.bf16.mxu0 0
  %761 = vmatmul.mubr.bf16.gmra.mxu0 %v226
  %v762 = vpop.f32.mrf.mxu0
  %v763 = vadd.f32 0.0, %v762
  %v764 = vpop.f32.mrf.mxu0
  %v765 = vpop.f32.mrf.mxu0
  %v766 = vadd.f32 0.0, %v765
  %v767 = vpop.f32.mrf.mxu0
  %768 = vmatprep.mubr.bf16.mxu0 0
  %769 = vmatmul.mubr.bf16.gmra.mxu0 %v229
  %v770 = vpop.f32.mrf.mxu0
  %v771 = vadd.f32 0.0, %v770
  %v772 = vpop.f32.mrf.mxu0
  %v773 = vpop.f32.mrf.mxu0
  %v774 = vadd.f32 0.0, %v773
  %v775 = vpop.f32.mrf.mxu0
  %776 = vmatprep.mubr.bf16.mxu0 0
  %777 = vmatmul.mubr.bf16.gmra.mxu0 %v232
  %v778 = vpop.f32.mrf.mxu0
  %v779 = vadd.f32 0.0, %v778
  %v780 = vpop.f32.mrf.mxu0
  %v781 = vpop.f32.mrf.mxu0
  %v782 = vadd.f32 0.0, %v781
  %v783 = vpop.f32.mrf.mxu0
  %784 = vmatprep.mubr.bf16.mxu0 0
  %785 = vmatmul.mubr.bf16.gmra.mxu0 %v627
  %v786 = vpop.f32.mrf.mxu0
  %v787 = vadd.f32 0.0, %v786
  %v788 = vpop.f32.mrf.mxu0
  %v789 = vpop.f32.mrf.mxu0
  %v790 = vadd.f32 0.0, %v789
  %v791 = vpop.f32.mrf.mxu0
  %792 = vdwg.mxu0
  %v793 = vadd.f32 %v466, %v667
  %v794 = vadd.f32 %v469, %v670
  %v795 = vadd.f32 %v474, %v675
  %v796 = vadd.f32 %v477, %v678
  %v797 = vadd.f32 %v482, %v683
  %v798 = vadd.f32 %v485, %v686
  %v799 = vadd.f32 %v490, %v691
  %v800 = vadd.f32 %v493, %v694
  %v801 = vadd.f32 %v498, %v699
  %v802 = vadd.f32 %v501, %v702
  %v803 = vadd.f32 %v506, %v707
  %v804 = vadd.f32 %v509, %v710
  %v805 = vadd.f32 %v514, %v715
  %v806 = vadd.f32 %v517, %v718
  %v807 = vadd.f32 %v522, %v723
  %v808 = vadd.f32 %v525, %v726
  %v809 = vadd.f32 %v530, %v731
  %v810 = vadd.f32 %v533, %v734
  %v811 = vadd.f32 %v538, %v739
  %v812 = vadd.f32 %v541, %v742
  %v813 = vadd.f32 %v546, %v747
  %v814 = vadd.f32 %v549, %v750
  %v815 = vadd.f32 %v554, %v755
  %v816 = vadd.f32 %v557, %v758
  %v817 = vadd.f32 %v562, %v763
  %v818 = vadd.f32 %v565, %v766
  %v819 = vadd.f32 %v570, %v771
  %v820 = vadd.f32 %v573, %v774
  %v821 = vadd.f32 %v578, %v779
  %v822 = vadd.f32 %v581, %v782
  %v823 = vadd.f32 %v586, %v787
  %v824 = vadd.f32 %v589, %v790
  %857 = vrot.lane.b32.xlu0 %v793, 96
  %v858 = vpop.permute.xlu0 %857
  %859 = vrot.lane.b32.xlu0 %v794, 96
  %v860 = vpop.permute.xlu0 %859
  %861 = vrot.lane.b32.xlu0 %v795, 96
  %v862 = vpop.permute.xlu0 %861
  %863 = vrot.lane.b32.xlu0 %v796, 96
  %v864 = vpop.permute.xlu0 %863
  %865 = vrot.lane.b32.xlu0 %v797, 96
  %v866 = vpop.permute.xlu0 %865
  %867 = vrot.lane.b32.xlu0 %v798, 96
  %v868 = vpop.permute.xlu0 %867
  %869 = vrot.lane.b32.xlu0 %v799, 96
  %v870 = vpop.permute.xlu0 %869
  %871 = vrot.lane.b32.xlu0 %v800, 96
  %v872 = vpop.permute.xlu0 %871
  %873 = vrot.lane.b32.xlu0 %v801, 96
  %v874 = vpop.permute.xlu0 %873
  %875 = vrot.lane.b32.xlu0 %v802, 96
  %v876 = vpop.permute.xlu0 %875
  %877 = vrot.lane.b32.xlu0 %v803, 96
  %v878 = vpop.permute.xlu0 %877
  %879 = vrot.lane.b32.xlu0 %v804, 96
  %v880 = vpop.permute.xlu0 %879
  %881 = vrot.lane.b32.xlu0 %v805, 96
  %v882 = vpop.permute.xlu0 %881
  %883 = vrot.lane.b32.xlu0 %v806, 96
  %v884 = vpop.permute.xlu0 %883
  %885 = vrot.lane.b32.xlu0 %v807, 96
  %v886 = vpop.permute.xlu0 %885
  %887 = vrot.lane.b32.xlu0 %v808, 96
  %v888 = vpop.permute.xlu0 %887
  %889 = vrot.lane.b32.xlu0 %v809, 96
  %v890 = vpop.permute.xlu0 %889
  %891 = vrot.lane.b32.xlu0 %v810, 96
  %v892 = vpop.permute.xlu0 %891
  %893 = vrot.lane.b32.xlu0 %v811, 96
  %v894 = vpop.permute.xlu0 %893
  %895 = vrot.lane.b32.xlu0 %v812, 96
  %v896 = vpop.permute.xlu0 %895
  %897 = vrot.lane.b32.xlu0 %v813, 96
  %v898 = vpop.permute.xlu0 %897
  %899 = vrot.lane.b32.xlu0 %v814, 96
  %v900 = vpop.permute.xlu0 %899
  %901 = vrot.lane.b32.xlu0 %v815, 96
  %v902 = vpop.permute.xlu0 %901
  %903 = vrot.lane.b32.xlu0 %v816, 96
  %v904 = vpop.permute.xlu0 %903
  %905 = vrot.lane.b32.xlu0 %v817, 96
  %v906 = vpop.permute.xlu0 %905
  %907 = vrot.lane.b32.xlu0 %v818, 96
  %v908 = vpop.permute.xlu0 %907
  %909 = vrot.lane.b32.xlu0 %v819, 96
  %v910 = vpop.permute.xlu0 %909
  %911 = vrot.lane.b32.xlu0 %v820, 96
  %v912 = vpop.permute.xlu0 %911
  %913 = vrot.lane.b32.xlu0 %v821, 96
  %v914 = vpop.permute.xlu0 %913
  %915 = vrot.lane.b32.xlu0 %v822, 96
  %v916 = vpop.permute.xlu0 %915
  %917 = vrot.lane.b32.xlu0 %v823, 96
  %v918 = vpop.permute.xlu0 %917
  %919 = vrot.lane.b32.xlu0 %v824, 96
  %v920 = vpop.permute.xlu0 %919
  %v953 = vmax.f32 %v793, %v858
  %v954 = vmax.f32 %v794, %v860
  %v955 = vmax.f32 %v795, %v862
  %v956 = vmax.f32 %v796, %v864
  %v957 = vmax.f32 %v797, %v866
  %v958 = vmax.f32 %v798, %v868
  %v959 = vmax.f32 %v799, %v870
  %v960 = vmax.f32 %v800, %v872
  %v961 = vmax.f32 %v801, %v874
  %v962 = vmax.f32 %v802, %v876
  %v963 = vmax.f32 %v803, %v878
  %v964 = vmax.f32 %v804, %v880
  %v965 = vmax.f32 %v805, %v882
  %v966 = vmax.f32 %v806, %v884
  %v967 = vmax.f32 %v807, %v886
  %v968 = vmax.f32 %v808, %v888
  %v969 = vmax.f32 %v809, %v890
  %v970 = vmax.f32 %v810, %v892
  %v971 = vmax.f32 %v811, %v894
  %v972 = vmax.f32 %v812, %v896
  %v973 = vmax.f32 %v813, %v898
  %v974 = vmax.f32 %v814, %v900
  %v975 = vmax.f32 %v815, %v902
  %v976 = vmax.f32 %v816, %v904
  %v977 = vmax.f32 %v817, %v906
  %v978 = vmax.f32 %v818, %v908
  %v979 = vmax.f32 %v819, %v910
  %v980 = vmax.f32 %v820, %v912
  %v981 = vmax.f32 %v821, %v914
  %v982 = vmax.f32 %v822, %v916
  %v983 = vmax.f32 %v823, %v918
  %v984 = vmax.f32 %v824, %v920
  %v985 = vmax.f32 %v953, %v955
  %v986 = vmax.f32 %v954, %v956
  %v987 = vmax.f32 %v957, %v959
  %v988 = vmax.f32 %v958, %v960
  %v989 = vmax.f32 %v961, %v963
  %v990 = vmax.f32 %v962, %v964
  %v991 = vmax.f32 %v965, %v967
  %v992 = vmax.f32 %v966, %v968
  %v993 = vmax.f32 %v969, %v971
  %v994 = vmax.f32 %v970, %v972
  %v995 = vmax.f32 %v973, %v975
  %v996 = vmax.f32 %v974, %v976
  %v997 = vmax.f32 %v977, %v979
  %v998 = vmax.f32 %v978, %v980
  %v999 = vmax.f32 %v981, %v983
  %v1000 = vmax.f32 %v982, %v984
  %1003 = vrot.lane.b32.xlu0 %v987, 32
  %v1004 = vpop.permute.xlu0 %1003
  %1005 = vrot.lane.b32.xlu0 %v988, 32
  %v1006 = vpop.permute.xlu0 %1005
  %1011 = vrot.lane.b32.xlu0 %v989, 64
  %v1012 = vpop.permute.xlu0 %1011
  %1013 = vrot.lane.b32.xlu0 %v990, 64
  %v1014 = vpop.permute.xlu0 %1013
  %1019 = vrot.lane.b32.xlu0 %v991, 96
  %v1020 = vpop.permute.xlu0 %1019
  %1021 = vrot.lane.b32.xlu0 %v992, 96
  %v1022 = vpop.permute.xlu0 %1021
  %1027 = vrot.lane.b32.xlu0 %v995, 32
  %v1028 = vpop.permute.xlu0 %1027
  %1029 = vrot.lane.b32.xlu0 %v996, 32
  %v1030 = vpop.permute.xlu0 %1029
  %1035 = vrot.lane.b32.xlu0 %v997, 64
  %v1036 = vpop.permute.xlu0 %1035
  %1037 = vrot.lane.b32.xlu0 %v998, 64
  %v1038 = vpop.permute.xlu0 %1037
  %1043 = vrot.lane.b32.xlu0 %v999, 96
  %v1044 = vpop.permute.xlu0 %1043
  %1045 = vrot.lane.b32.xlu0 %v1000, 96
  %v1046 = vpop.permute.xlu0 %1045
  %vm1049 = vcmask 261120
  %v1050 = vsel %vm1049, %v985, %v1004
  %v1051 = vsel %vm1049, %v986, %v1006
  %vm1052 = vcmask 523264
  %v1053 = vsel %vm1052, %v1050, %v1012
  %v1054 = vsel %vm1052, %v1051, %v1014
  %vm1055 = vcmask 785408
  %v1056 = vsel %vm1055, %v1053, %v1020
  %v1057 = vsel %vm1055, %v1054, %v1022
  %v1058 = vsel %vm1049, %v993, %v1028
  %v1059 = vsel %vm1049, %v994, %v1030
  %v1060 = vsel %vm1052, %v1058, %v1036
  %v1061 = vsel %vm1052, %v1059, %v1038
  %v1062 = vsel %vm1055, %v1060, %v1044
  %v1063 = vsel %vm1055, %v1061, %v1046
  %v1064 = vld [vmem:[%s2] sm:$0x3]
  %v1066 = vlaneseq
  %v1067 = vshrl.u32 %v1066, 7
  %v1068 = vsub.s32 0, %v1067
  %v1069 = vrot.slane %v1064, %v1068
  %v1070 = vlaneseq
  %v1071 = vshrl.u32 %v1070, 7
  %v1072 = vsub.s32 1, %v1071
  %v1073 = vrot.slane %v1064, %v1072
  %v1076 = vadd.f32 %v1056, %v1069
  %v1077 = vadd.f32 %v1062, %v1073
  %v1078 = vadd.f32 %v1057, %v1069
  %v1079 = vadd.f32 %v1063, %v1073
  %v1080 = vmax.f32 %v1076, 0.0
  %v1081 = vmax.f32 %v1077, 0.0
  %v1082 = vmax.f32 %v1078, 0.0
  %v1083 = vmax.f32 %v1079, 0.0
  %v1084 = vpack.c.bf16 %v1082, %v1080
  %v1085 = vpack.c.bf16 %v1083, %v1081
  %v1086 = vld [vmem:[%s3] sm:$0xf]
  %v1087 = vld [vmem:[%s3 + $0x4] sm:$0xf]
  %v1088 = vld [vmem:[%s3 + $0x8] sm:$0xf]
  %v1089 = vld [vmem:[%s3 + $0xc] sm:$0xf]
  %v1090 = vld [vmem:[%s3 + $0x10] sm:$0xf]
  %v1091 = vld [vmem:[%s3 + $0x14] sm:$0xf]
  %v1092 = vld [vmem:[%s3 + $0x18] sm:$0xf]
  %v1093 = vld [vmem:[%s3 + $0x1c] sm:$0xf]
  %v1094 = vld [vmem:[%s3 + $0x20] sm:$0xf]
  %v1095 = vld [vmem:[%s3 + $0x24] sm:$0xf]
  %v1096 = vld [vmem:[%s3 + $0x28] sm:$0xf]
  %v1097 = vld [vmem:[%s3 + $0x2c] sm:$0xf]
  %v1098 = vld [vmem:[%s3 + $0x30] sm:$0xf]
  %v1099 = vld [vmem:[%s3 + $0x34] sm:$0xf]
  %v1100 = vld [vmem:[%s3 + $0x38] sm:$0xf]
  %v1101 = vld [vmem:[%s3 + $0x3c] sm:$0xf]
  %v1102 = vld [vmem:[%s3 + $0x40] sm:$0xf]
  %v1103 = vld [vmem:[%s3 + $0x44] sm:$0xf]
  %v1104 = vld [vmem:[%s3 + $0x48] sm:$0xf]
  %v1105 = vld [vmem:[%s3 + $0x4c] sm:$0xf]
  %v1106 = vld [vmem:[%s3 + $0x50] sm:$0xf]
  %v1107 = vld [vmem:[%s3 + $0x54] sm:$0xf]
  %v1108 = vld [vmem:[%s3 + $0x58] sm:$0xf]
  %v1109 = vld [vmem:[%s3 + $0x5c] sm:$0xf]
  %v1110 = vld [vmem:[%s3 + $0x60] sm:$0xf]
  %v1111 = vld [vmem:[%s3 + $0x64] sm:$0xf]
  %v1112 = vld [vmem:[%s3 + $0x68] sm:$0xf]
  %v1113 = vld [vmem:[%s3 + $0x6c] sm:$0xf]
  %v1114 = vld [vmem:[%s3 + $0x70] sm:$0xf]
  %v1115 = vld [vmem:[%s3 + $0x74] sm:$0xf]
  %v1116 = vld [vmem:[%s3 + $0x78] sm:$0xf]
  %v1117 = vld [vmem:[%s3 + $0x7c] sm:$0xf]
  %v1118 = vld [vmem:[%s4] sm:$0x1]
  %v1120 = vlaneseq
  %v1121 = vshrl.u32 %v1120, 7
  %v1122 = vsub.s32 0, %v1121
  %v1123 = vrot.slane %v1118, %v1122
  %v1157 = vunpack.c.l.b16 %v1086
  %v1158 = vunpack.c.l.b16 %v1087
  %v1159 = vunpack.c.l.b16 %v1088
  %v1160 = vunpack.c.l.b16 %v1089
  %v1161 = vunpack.c.l.b16 %v1090
  %v1162 = vunpack.c.l.b16 %v1091
  %v1163 = vunpack.c.l.b16 %v1092
  %v1164 = vunpack.c.l.b16 %v1093
  %v1165 = vunpack.c.l.b16 %v1094
  %v1166 = vunpack.c.l.b16 %v1095
  %v1167 = vunpack.c.l.b16 %v1096
  %v1168 = vunpack.c.l.b16 %v1097
  %v1169 = vunpack.c.l.b16 %v1098
  %v1170 = vunpack.c.l.b16 %v1099
  %v1171 = vunpack.c.l.b16 %v1100
  %v1172 = vunpack.c.l.b16 %v1101
  %v1173 = vunpack.c.l.b16 %v1102
  %v1174 = vunpack.c.l.b16 %v1103
  %v1175 = vunpack.c.l.b16 %v1104
  %v1176 = vunpack.c.l.b16 %v1105
  %v1177 = vunpack.c.l.b16 %v1106
  %v1178 = vunpack.c.l.b16 %v1107
  %v1179 = vunpack.c.l.b16 %v1108
  %v1180 = vunpack.c.l.b16 %v1109
  %v1181 = vunpack.c.l.b16 %v1110
  %v1182 = vunpack.c.l.b16 %v1111
  %v1183 = vunpack.c.l.b16 %v1112
  %v1184 = vunpack.c.l.b16 %v1113
  %v1185 = vunpack.c.l.b16 %v1114
  %v1186 = vunpack.c.l.b16 %v1115
  %v1187 = vunpack.c.l.b16 %v1116
  %v1188 = vunpack.c.l.b16 %v1117
  %v1189 = vpack.c.b16 %v1158, %v1157
  %v1190 = vpack.c.b16 %v1160, %v1159
  %v1191 = vpack.c.b16 %v1162, %v1161
  %v1192 = vpack.c.b16 %v1164, %v1163
  %v1193 = vpack.c.b16 %v1166, %v1165
  %v1194 = vpack.c.b16 %v1168, %v1167
  %v1195 = vpack.c.b16 %v1170, %v1169
  %v1196 = vpack.c.b16 %v1172, %v1171
  %v1197 = vpack.c.b16 %v1174, %v1173
  %v1198 = vpack.c.b16 %v1176, %v1175
  %v1199 = vpack.c.b16 %v1178, %v1177
  %v1200 = vpack.c.b16 %v1180, %v1179
  %v1201 = vpack.c.b16 %v1182, %v1181
  %v1202 = vpack.c.b16 %v1184, %v1183
  %v1203 = vpack.c.b16 %v1186, %v1185
  %v1204 = vpack.c.b16 %v1188, %v1187
  %1221 = vmatprep.subr.bf16.mxu0 0
  %1222 = vmatpush1.bf16.msra.mxu0 %v1196
  %1223 = vmatprep.subr.bf16.mxu0 0
  %1224 = vmatpush1.bf16.msra.mxu0 %v1195
  %1225 = vmatprep.subr.bf16.mxu0 0
  %1226 = vmatpush1.bf16.msra.mxu0 %v1194
  %1227 = vmatprep.subr.bf16.mxu0 0
  %1228 = vmatpush1.bf16.msra.mxu0 %v1193
  %1229 = vmatprep.subr.bf16.mxu0 0
  %1230 = vmatpush1.bf16.msra.mxu0 %v1192
  %1231 = vmatprep.subr.bf16.mxu0 0
  %1232 = vmatpush1.bf16.msra.mxu0 %v1191
  %1233 = vmatprep.subr.bf16.mxu0 0
  %1234 = vmatpush1.bf16.msra.mxu0 %v1190
  %1235 = vmatprep.subr.bf16.mxu0 0
  %1236 = vmatpush1.bf16.msra.mxu0 %v1189
  %1237 = vmatprep.subr.bf16.mxu0 0
  %1238 = vmatpush2.bf16.msra.mxu0 %v1204
  %1239 = vmatprep.subr.bf16.mxu0 0
  %1240 = vmatpush2.bf16.msra.mxu0 %v1203
  %1241 = vmatprep.subr.bf16.mxu0 0
  %1242 = vmatpush2.bf16.msra.mxu0 %v1202
  %1243 = vmatprep.subr.bf16.mxu0 0
  %1244 = vmatpush2.bf16.msra.mxu0 %v1201
  %1245 = vmatprep.subr.bf16.mxu0 0
  %1246 = vmatpush2.bf16.msra.mxu0 %v1200
  %1247 = vmatprep.subr.bf16.mxu0 0
  %1248 = vmatpush2.bf16.msra.mxu0 %v1199
  %1249 = vmatprep.subr.bf16.mxu0 0
  %1250 = vmatpush2.bf16.msra.mxu0 %v1198
  %1251 = vmatprep.subr.bf16.mxu0 0
  %1252 = vmatpush2.bf16.msra.mxu0 %v1197
  %1253 = vmatprep.mubr.bf16.mxu0 %v1085
  %1254 = vmatmul.mubr.bf16.gmra.mxu0 %v1084
  %v1255 = vpop.f32.mrf.mxu0
  %v1256 = vadd.f32 %v1123, %v1255
  %v1257 = vpop.f32.mrf.mxu0
  %v1258 = vpop.f32.mrf.mxu0
  %v1259 = vadd.f32 %v1123, %v1258
  %v1260 = vpop.f32.mrf.mxu0
  %1261 = vdwg.mxu0
  %v1262 = vmax.f32 %v1256, 0.0
  %v1263 = vmax.f32 %v1259, 0.0
  %v1264 = vpack.c.bf16 %v1263, %v1262
  %v1265 = vld [vmem:[%s5] sm:$0xf]
  %v1266 = vld [vmem:[%s5 + $0x4] sm:$0xf]
  %v1267 = vld [vmem:[%s8] sm:$0xf]
  %v1268 = vld [vmem:[%s8 + $0x4] sm:$0xf]
  %v1269 = vld [vmem:[%s6] sm:$0x3]
  %v1272 = vunpack.c.l.b16 %v1267
  %v1273 = vunpack.c.l.b16 %v1268
  %v1274 = vpack.c.b16 %v1273, %v1272
  %vm1275 = vcmask 23552
  %v1277 = vsel %vm1275, %v1274, 0
  %vm1279 = vcmask 1040384
  %vm1280 = vcmask 1041408
  %v1281 = vsel %vm1279, 4294967295, 65535
  %v1282 = vsel %vm1280, %v1281, 0
  %v1284 = vand.u32 %v1269, %v1282
  %1286 = vmatprep.subr.bf16.mxu0 0
  %1287 = vmatpush1.bf16.msra.mxu0 0
  %1288 = vmatprep.subr.bf16.mxu0 0
  %1289 = vmatpush1.bf16.msra.mxu0 0
  %1290 = vmatprep.subr.bf16.mxu0 0
  %1291 = vmatpush1.bf16.msra.mxu0 0
  %1292 = vmatprep.subr.bf16.mxu0 0
  %1293 = vmatpush1.bf16.msra.mxu0 0
  %1294 = vmatprep.subr.bf16.mxu0 0
  %1295 = vmatpush1.bf16.msra.mxu0 0
  %1296 = vmatprep.subr.bf16.mxu0 0
  %1297 = vmatpush1.bf16.msra.mxu0 0
  %1298 = vmatprep.subr.bf16.mxu0 0
  %1299 = vmatpush1.bf16.msra.mxu0 0
  %1300 = vmatprep.subr.bf16.mxu0 0
  %1301 = vmatpush1.bf16.msra.mxu0 %v1284
  %1302 = vmatprep.subr.bf16.mxu0 0
  %1303 = vmatpush2.bf16.msra.mxu0 0
  %1304 = vmatprep.subr.bf16.mxu0 0
  %1305 = vmatpush2.bf16.msra.mxu0 0
  %1306 = vmatprep.subr.bf16.mxu0 0
  %1307 = vmatpush2.bf16.msra.mxu0 0
  %1308 = vmatprep.subr.bf16.mxu0 0
  %1309 = vmatpush2.bf16.msra.mxu0 0
  %1310 = vmatprep.subr.bf16.mxu0 0
  %1311 = vmatpush2.bf16.msra.mxu0 0
  %1312 = vmatprep.subr.bf16.mxu0 0
  %1313 = vmatpush2.bf16.msra.mxu0 0
  %1314 = vmatprep.subr.bf16.mxu0 0
  %1315 = vmatpush2.bf16.msra.mxu0 0
  %1316 = vmatprep.subr.bf16.mxu0 0
  %1317 = vmatpush2.bf16.msra.mxu0 0
  %1318 = vmatprep.mubr.bf16.mxu0 0
  %1319 = vmatmul.mubr.bf16.gmra.mxu0 %v1277
  %v1320 = vpop.f32.mrf.mxu0
  %v1321 = vadd.f32 0.0, %v1320
  %v1322 = vpop.f32.mrf.mxu0
  %v1323 = vpop.f32.mrf.mxu0
  %v1324 = vadd.f32 0.0, %v1323
  %v1325 = vpop.f32.mrf.mxu0
  %1326 = vdwg.mxu0
  %v1329 = vunpack.c.l.b16 %v1265
  %v1330 = vunpack.c.l.b16 %v1266
  %v1331 = vpack.c.b16 %v1330, %v1329
  %vm1333 = vcmask 130048
  %v1335 = vsel %vm1333, %v1264, 0
  %1337 = vmatprep.subr.bf16.mxu0 0
  %1338 = vmatpush1.bf16.msra.mxu0 0
  %1339 = vmatprep.subr.bf16.mxu0 0
  %1340 = vmatpush1.bf16.msra.mxu0 0
  %1341 = vmatprep.subr.bf16.mxu0 0
  %1342 = vmatpush1.bf16.msra.mxu0 0
  %1343 = vmatprep.subr.bf16.mxu0 0
  %1344 = vmatpush1.bf16.msra.mxu0 0
  %1345 = vmatprep.subr.bf16.mxu0 0
  %1346 = vmatpush1.bf16.msra.mxu0 0
  %1347 = vmatprep.subr.bf16.mxu0 0
  %1348 = vmatpush1.bf16.msra.mxu0 0
  %1349 = vmatprep.subr.bf16.mxu0 0
  %1350 = vmatpush1.bf16.msra.mxu0 0
  %1351 = vmatprep.subr.bf16.mxu0 0
  %1352 = vmatpush1.bf16.msra.mxu0 %v1331
  %1353 = vmatprep.subr.bf16.mxu0 0
  %1354 = vmatpush2.bf16.msra.mxu0 0
  %1355 = vmatprep.subr.bf16.mxu0 0
  %1356 = vmatpush2.bf16.msra.mxu0 0
  %1357 = vmatprep.subr.bf16.mxu0 0
  %1358 = vmatpush2.bf16.msra.mxu0 0
  %1359 = vmatprep.subr.bf16.mxu0 0
  %1360 = vmatpush2.bf16.msra.mxu0 0
  %1361 = vmatprep.subr.bf16.mxu0 0
  %1362 = vmatpush2.bf16.msra.mxu0 0
  %1363 = vmatprep.subr.bf16.mxu0 0
  %1364 = vmatpush2.bf16.msra.mxu0 0
  %1365 = vmatprep.subr.bf16.mxu0 0
  %1366 = vmatpush2.bf16.msra.mxu0 0
  %1367 = vmatprep.subr.bf16.mxu0 0
  %1368 = vmatpush2.bf16.msra.mxu0 0
  %1369 = vmatprep.mubr.bf16.mxu0 0
  %1370 = vmatmul.mubr.bf16.gmra.mxu0 %v1335
  %v1371 = vpop.f32.mrf.mxu0
  %v1372 = vadd.f32 %v1321, %v1371
  %v1373 = vpop.f32.mrf.mxu0
  %v1374 = vpop.f32.mrf.mxu0
  %v1375 = vadd.f32 %v1324, %v1374
  %v1376 = vpop.f32.mrf.mxu0
  %1377 = vdwg.mxu0
  %v1378 = vld [vmem:[%s7] sm:$0x1]
  %v1380 = vlaneseq
  %v1381 = vshrl.u32 %v1380, 7
  %v1382 = vsub.s32 0, %v1381
  %v1383 = vrot.slane %v1378, %v1382
  %v1385 = vadd.f32 %v1372, %v1383
  %v1386 = vadd.f32 %v1375, %v1383
  %vm1387 = vcmask 39936
  %1388 = vst.msk [vmem:[%s9] sm:$0xff] %vm1387, %v1385
  %1389 = vst.msk [vmem:[%s9 + $0x8] sm:$0xff] %vm1387, %v1386
  // Predicated region
  $region38: #{dqn_forward.1} parent=0 // pred_check
    _
  $region39: #{dqn_forward.1} parent=0 // pred_check_branch
    %1391 = sbr.rel (0) target = $region41
  $region40: #{dqn_forward.1} parent=0 // pred_region
    _
  $region41: #{dqn_forward.1} parent=0 // pred_fallthru
    _
  // Predicated region
  $region42: #{dqn_forward.1} parent=0 // pred_check
    _
  $region43: #{dqn_forward.1} parent=0 // pred_check_branch
    %1393 = sbr.rel (0) target = $region45
  $region44: #{dqn_forward.1} parent=0 // pred_region
    _
  $region45: #{dqn_forward.1} parent=0 // pred_fallthru
    _

</llo_original>
